<compile_context>
chip_gen: v5e
topology: v5e:2x2
jax: 0.10.0
libtpu: 0.0.40
codegen_flags: <defaults>
</compile_context>

<pallas_src>
import jax
import jax.numpy as jnp
from jax import lax
from jax.experimental import pallas as pl
from jax.experimental.pallas import tpu as pltpu


def _lovasz_hinge_kernel(yf_ref, x_ref, y_ref, xcol_ref, ycol_ref, o_ref):
    # yf_ref:   (1, P)  full label row (gts + matmul LHS)
    # x_ref:    (1, Tb) logits of this lane strip
    # y_ref:    (1, Tb) labels of this lane strip
    # xcol_ref: (P, 1)  full logits, column layout
    # ycol_ref: (P, 1)  full labels, column layout
    # o_ref:    (1, 128) per-image loss accumulator (scalar broadcast on lanes)
    j = pl.program_id(1)
    P = xcol_ref.shape[0]
    Tb = x_ref.shape[-1]

    labels_full = yf_ref[...]                                  # (1, P)  0/1
    logits_b = x_ref[...]                                      # (1, Tb)
    labels_b = y_ref[...]                                      # (1, Tb)
    logits_a = xcol_ref[...]                                   # (P, 1)
    labels_a = ycol_ref[...]                                   # (P, 1)

    # Hinge errors in both layouts (identical f32 arithmetic -> identical bits,
    # so the equality tie-break below is consistent).
    errors_b = 1.0 - logits_b * (2.0 * labels_b - 1.0)         # (1, Tb)
    errors_a = 1.0 - logits_a * (2.0 * labels_a - 1.0)         # (P, 1)

    # before[a, b] = pixel a precedes pixel b in the stable descending sort.
    a_idx = lax.broadcasted_iota(jnp.int32, (P, Tb), 0)
    b_idx = j * Tb + lax.broadcasted_iota(jnp.int32, (P, Tb), 1)
    before = (errors_a > errors_b) | ((errors_a == errors_b) & (a_idx < b_idx))
    before_f = before.astype(jnp.float32)          # the only live (P, Tb) buffer

    # Fused MXU reduction over the sublane axis a (operands are 0/1 -> exact):
    #   row 0: rank_b = sum_a before[a, b]
    #   row 1: csum_b = sum_a labels[a] * before[a, b]
    lhs = jnp.concatenate([jnp.ones_like(labels_full), labels_full], axis=0)  # (2, P)
    sums = jnp.dot(lhs, before_f,
                   preferred_element_type=jnp.float32,
                   precision=lax.Precision.DEFAULT)            # (2, Tb)
    rank = sums[0:1, :]                                        # (1, Tb)
    csum = sums[1:2, :]                                        # (1, Tb)

    gts = jnp.sum(labels_full)                                 # scalar (count)

    # Closed-form Lovasz gradient at sorted position rank_b.
    c = csum + labels_b                    # cumsum(gt_sorted) at position rank_b
    union = gts + rank + 1.0 - c           # >= max(gts, rank+1) >= 1, always safe
    jac = 1.0 - (gts - c) / union

    is_first = rank < 0.5                  # rank_b == 0  ->  jaccard_prev = 0
    union_prev = jnp.where(is_first, 1.0, gts + rank - csum)
    jac_prev = jnp.where(is_first, 0.0, 1.0 - (gts - csum) / union_prev)
    grad = jac - jac_prev

    partial = jnp.sum(jnp.maximum(errors_b, 0.0) * grad)

    @pl.when(j == 0)
    def _():
        o_ref[...] = jnp.zeros_like(o_ref)
    o_ref[...] = o_ref[...] + partial


def _pick_strip(P):
    """Lane-strip width Tb: bounds live VMEM to O(P*Tb) for large images."""
    if P <= 512:
        return P
    for tb in (512, 384, 256, 128):
        if P % tb == 0:
            return tb
    return P  # odd P: single full-width strip (covered by the vmem bump below)


def lovasz_hinge_loss(input_nchw, target_nchw):
    """Equivalent of LovaszHingeLoss.forward(input, target) (per_image=True)."""
    N, C, H, W = input_nchw.shape
    assert C == 1, "module squeezes channel dim 1; expects C == 1"
    P = H * W

    x_row = input_nchw.reshape(N, 1, P).astype(jnp.float32)
    y_row = target_nchw.reshape(N, 1, P).astype(jnp.float32)
    # Column layout copies: avoids any in-kernel (lane -> sublane) transpose.
    x_col = input_nchw.reshape(N, P, 1).astype(jnp.float32)
    y_col = target_nchw.reshape(N, P, 1).astype(jnp.float32)

    Tb = _pick_strip(P)
    n_strips = P // Tb

    params = {"dimension_semantics": ("parallel", "arbitrary")}
    # rough live-VMEM estimate: comparison strip (+ mask/intermediates) and the
    # lane-padded (P,1) column inputs (double-buffered); bump the scoped limit
    # only when actually needed, stay well under v7x's 64 MiB physical VMEM.
    live_bytes = 3 * P * Tb * 4 + 4 * P * 512
    if live_bytes > 24 * 1024 * 1024:
        params["vmem_limit_bytes"] = min(live_bytes + (8 << 20), 56 * 1024 * 1024)

    out = pl.pallas_call(
        _lovasz_hinge_kernel,
        out_shape=jax.ShapeDtypeStruct((N, 1, 128), jnp.float32),
        grid_spec=pltpu.PrefetchScalarGridSpec(
            num_scalar_prefetch=0,
            grid=(N, n_strips),
            in_specs=[
                pl.BlockSpec((None, 1, P), lambda i, j: (i, 0, 0)),   # full labels row
                pl.BlockSpec((None, 1, Tb), lambda i, j: (i, 0, j)),  # logits strip
                pl.BlockSpec((None, 1, Tb), lambda i, j: (i, 0, j)),  # labels strip
                pl.BlockSpec((None, P, 1), lambda i, j: (i, 0, 0)),   # logits column
                pl.BlockSpec((None, P, 1), lambda i, j: (i, 0, 0)),   # labels column
            ],
            out_specs=pl.BlockSpec((None, 1, 128), lambda i, j: (i, 0, 0)),
        ),
        compiler_params=pltpu.CompilerParams(**params),
    )(y_row, x_row, y_row, x_col, y_col)

    per_image_loss = out[:, 0, 0]        # one scalar per image
    return jnp.mean(per_image_loss)      # per_image=True -> mean over images


def _reference(input_nchw, target_nchw):
    """Pure-JAX reference of the PyTorch lovasz_hinge(per_image=True)."""
    N = input_nchw.shape[0]
    logits = input_nchw[:, 0].reshape(N, -1).astype(jnp.float32)
    labels = target_nchw[:, 0].reshape(N, -1).astype(jnp.float32)

    def per_image(lg, lb):
        signs = 2.0 * lb - 1.0
        errors = 1.0 - lg * signs
        order = jnp.argsort(-errors)
        errors_sorted = errors[order]
        gt_sorted = lb[order]
        gts = jnp.sum(gt_sorted)
        inter = gts - jnp.cumsum(gt_sorted)
        union = gts + jnp.cumsum(1.0 - gt_sorted)
        jac = 1.0 - inter / union
        grad = jnp.concatenate([jac[:1], jac[1:] - jac[:-1]])
        return jnp.sum(jnp.maximum(errors_sorted, 0.0) * grad)

    return jnp.mean(jax.vmap(per_image)(logits, labels))


if __name__ == "__main__":
    key = jax.random.PRNGKey(0)
    k1, k2 = jax.random.split(key)
    # Small shapes consistent with the module: (N, 1, H, W) logits + binary mask.
    x = jax.random.normal(k1, (2, 1, 16, 16), dtype=jnp.float32)
    t = (jax.random.uniform(k2, (2, 1, 16, 16)) > 0.5).astype(jnp.float32)

    loss = jax.jit(lovasz_hinge_loss)(x, t)
    loss = jax.block_until_ready(loss)

    ref = _reference(x, t)
    assert jnp.allclose(loss, ref, rtol=1e-3, atol=1e-3), (loss, ref)
    print("KERNEL_OK")
</pallas_src>

<mosaic_0001>
module attributes {stable_mosaic.version = 11 : i64} {
  func.func @_lovasz_hinge_kernel(%arg0: i32, %arg1: i32, %arg2: memref<1x1x256xf32, #tpu.memory_space<vmem>>, %arg3: memref<1x1x256xf32, #tpu.memory_space<vmem>>, %arg4: memref<1x1x256xf32, #tpu.memory_space<vmem>>, %arg5: memref<1x256x1xf32, #tpu.memory_space<vmem>>, %arg6: memref<1x256x1xf32, #tpu.memory_space<vmem>>, %arg7: memref<1x1x128xf32, #tpu.memory_space<vmem>>) attributes {dimension_semantics = [#tpu.dimension_semantics<parallel>, #tpu.dimension_semantics<arbitrary>], iteration_bounds = array<i64: 2, 1>, scalar_prefetch = 0 : i64, scratch_operands = 0 : i64, tpu.core_type = #tpu.core_type<tc>, window_params = [{transform_indices = @transform_0, window_bounds = array<i64: 1, 1, 256>}, {transform_indices = @transform_1, window_bounds = array<i64: 1, 1, 256>}, {transform_indices = @transform_2, window_bounds = array<i64: 1, 1, 256>}, {transform_indices = @transform_3, window_bounds = array<i64: 1, 256, 1>}, {transform_indices = @transform_4, window_bounds = array<i64: 1, 256, 1>}, {transform_indices = @transform_5, window_bounds = array<i64: 1, 1, 128>}]} {
    %c0 = arith.constant 0 : index
    %c0_0 = arith.constant 0 : index
    %c0_1 = arith.constant 0 : index
    %0 = vector.load %arg2[%c0, %c0_0, %c0_1] : memref<1x1x256xf32, #tpu.memory_space<vmem>>, vector<1x1x256xf32>
    %1 = vector.shape_cast %0 : vector<1x1x256xf32> to vector<1x256xf32>
    %c0_2 = arith.constant 0 : index
    %c0_3 = arith.constant 0 : index
    %c0_4 = arith.constant 0 : index
    %2 = vector.load %arg3[%c0_2, %c0_3, %c0_4] : memref<1x1x256xf32, #tpu.memory_space<vmem>>, vector<1x1x256xf32>
    %3 = vector.shape_cast %2 : vector<1x1x256xf32> to vector<1x256xf32>
    %c0_5 = arith.constant 0 : index
    %c0_6 = arith.constant 0 : index
    %c0_7 = arith.constant 0 : index
    %4 = vector.load %arg4[%c0_5, %c0_6, %c0_7] : memref<1x1x256xf32, #tpu.memory_space<vmem>>, vector<1x1x256xf32>
    %5 = vector.shape_cast %4 : vector<1x1x256xf32> to vector<1x256xf32>
    %c0_8 = arith.constant 0 : index
    %c0_9 = arith.constant 0 : index
    %c0_10 = arith.constant 0 : index
    %6 = vector.load %arg5[%c0_8, %c0_9, %c0_10] : memref<1x256x1xf32, #tpu.memory_space<vmem>>, vector<1x256x1xf32>
    %7 = vector.shape_cast %6 : vector<1x256x1xf32> to vector<256x1xf32>
    %c0_11 = arith.constant 0 : index
    %c0_12 = arith.constant 0 : index
    %c0_13 = arith.constant 0 : index
    %8 = vector.load %arg6[%c0_11, %c0_12, %c0_13] : memref<1x256x1xf32, #tpu.memory_space<vmem>>, vector<1x256x1xf32>
    %9 = vector.shape_cast %8 : vector<1x256x1xf32> to vector<256x1xf32>
    %cst = arith.constant 2.000000e+00 : f32
    %10 = vector.broadcast %cst : f32 to vector<1x256xf32>
    %11 = arith.mulf %10, %5 : vector<1x256xf32>
    %cst_14 = arith.constant 1.000000e+00 : f32
    %12 = vector.broadcast %cst_14 : f32 to vector<1x256xf32>
    %13 = arith.subf %11, %12 : vector<1x256xf32>
    %14 = arith.mulf %3, %13 : vector<1x256xf32>
    %cst_15 = arith.constant 1.000000e+00 : f32
    %15 = vector.broadcast %cst_15 : f32 to vector<1x256xf32>
    %16 = arith.subf %15, %14 : vector<1x256xf32>
    %cst_16 = arith.constant 2.000000e+00 : f32
    %17 = vector.broadcast %cst_16 : f32 to vector<256x1xf32>
    %18 = arith.mulf %17, %9 : vector<256x1xf32>
    %cst_17 = arith.constant 1.000000e+00 : f32
    %19 = vector.broadcast %cst_17 : f32 to vector<256x1xf32>
    %20 = arith.subf %18, %19 : vector<256x1xf32>
    %21 = arith.mulf %7, %20 : vector<256x1xf32>
    %cst_18 = arith.constant 1.000000e+00 : f32
    %22 = vector.broadcast %cst_18 : f32 to vector<256x1xf32>
    %23 = arith.subf %22, %21 : vector<256x1xf32>
    %24 = tpu.iota {dimensions = array<i32: 0>} : vector<256x256xi32>
    %c256_i32 = arith.constant 256 : i32
    %25 = arith.muli %arg1, %c256_i32 : i32
    %26 = tpu.iota {dimensions = array<i32: 1>} : vector<256x256xi32>
    %27 = vector.broadcast %25 : i32 to vector<256x256xi32>
    %28 = arith.addi %27, %26 : vector<256x256xi32>
    %29 = vector.broadcast %23 : vector<256x1xf32> to vector<256x256xf32>
    %30 = vector.broadcast %16 : vector<1x256xf32> to vector<256x256xf32>
    %31 = arith.cmpf ogt, %29, %30 : vector<256x256xf32>
    %32 = vector.broadcast %23 : vector<256x1xf32> to vector<256x256xf32>
    %33 = vector.broadcast %16 : vector<1x256xf32> to vector<256x256xf32>
    %34 = arith.cmpf oeq, %32, %33 : vector<256x256xf32>
    %35 = arith.cmpi slt, %24, %28 : vector<256x256xi32>
    %36 = arith.andi %34, %35 : vector<256x256xi1>
    %37 = arith.ori %31, %36 : vector<256x256xi1>
    %38 = arith.extui %37 : vector<256x256xi1> to vector<256x256xi32>
    %39 = arith.sitofp %38 : vector<256x256xi32> to vector<256x256xf32>
    %cst_19 = arith.constant 1.000000e+00 : f32
    %40 = vector.broadcast %cst_19 : f32 to vector<1x256xf32>
    %41 = tpu.concatenate %40, %1 in 0 : vector<1x256xf32>, vector<1x256xf32> -> vector<2x256xf32>
    %cst_20 = arith.constant dense<0.000000e+00> : vector<2x256xf32>
    %42 = tpu.matmul %41, %39, %cst_20 {dimension_numbers = #tpu.dot_dimension_numbers<[1], [0], [0], [1], [0, 0, 1, 1], [], []>} : vector<2x256xf32>, vector<256x256xf32>, vector<2x256xf32> -> vector<2x256xf32>
    %43 = vector.extract_strided_slice %42 {offsets = [0, 0], sizes = [1, 256], strides = [1, 1]} : vector<2x256xf32> to vector<1x256xf32>
    %44 = vector.extract_strided_slice %42 {offsets = [1, 0], sizes = [1, 256], strides = [1, 1]} : vector<2x256xf32> to vector<1x256xf32>
    %45 = vector.shape_cast %1 : vector<1x256xf32> to vector<1x1x256xf32>
    %cst_21 = arith.constant dense<0.000000e+00> : vector<1xf32>
    %46 = vector.multi_reduction <add>, %45, %cst_21 [1, 2] : vector<1x1x256xf32> to vector<1xf32>
    %47 = vector.shape_cast %46 : vector<1xf32> to vector<1x1x1xf32>
    %48 = vector.extract %47[0, 0, 0] : f32 from vector<1x1x1xf32>
    %49 = arith.addf %44, %5 : vector<1x256xf32>
    %50 = vector.broadcast %48 : f32 to vector<1x256xf32>
    %51 = arith.addf %50, %43 : vector<1x256xf32>
    %cst_22 = arith.constant 1.000000e+00 : f32
    %52 = vector.broadcast %cst_22 : f32 to vector<1x256xf32>
    %53 = arith.addf %51, %52 : vector<1x256xf32>
    %54 = arith.subf %53, %49 : vector<1x256xf32>
    %55 = vector.broadcast %48 : f32 to vector<1x256xf32>
    %56 = arith.subf %55, %49 : vector<1x256xf32>
    %57 = arith.divf %56, %54 : vector<1x256xf32>
    %cst_23 = arith.constant 1.000000e+00 : f32
    %58 = vector.broadcast %cst_23 : f32 to vector<1x256xf32>
    %59 = arith.subf %58, %57 : vector<1x256xf32>
    %cst_24 = arith.constant 5.000000e-01 : f32
    %60 = vector.broadcast %cst_24 : f32 to vector<1x256xf32>
    %61 = arith.cmpf olt, %43, %60 : vector<1x256xf32>
    %62 = vector.broadcast %48 : f32 to vector<1x256xf32>
    %63 = arith.addf %62, %43 : vector<1x256xf32>
    %64 = arith.subf %63, %44 : vector<1x256xf32>
    %cst_25 = arith.constant 1.000000e+00 : f32
    %65 = vector.broadcast %cst_25 : f32 to vector<1x256xf32>
    %66 = arith.select %61, %65, %64 : vector<1x256xi1>, vector<1x256xf32>
    %67 = vector.broadcast %48 : f32 to vector<1x256xf32>
    %68 = arith.subf %67, %44 : vector<1x256xf32>
    %69 = arith.divf %68, %66 : vector<1x256xf32>
    %cst_26 = arith.constant 1.000000e+00 : f32
    %70 = vector.broadcast %cst_26 : f32 to vector<1x256xf32>
    %71 = arith.subf %70, %69 : vector<1x256xf32>
    %cst_27 = arith.constant 0.000000e+00 : f32
    %72 = vector.broadcast %cst_27 : f32 to vector<1x256xf32>
    %73 = arith.select %61, %72, %71 : vector<1x256xi1>, vector<1x256xf32>
    %74 = arith.subf %59, %73 : vector<1x256xf32>
    %cst_28 = arith.constant 0.000000e+00 : f32
    %75 = vector.broadcast %cst_28 : f32 to vector<1x256xf32>
    %76 = arith.maximumf %16, %75 : vector<1x256xf32>
    %77 = arith.mulf %76, %74 : vector<1x256xf32>
    %78 = vector.shape_cast %77 : vector<1x256xf32> to vector<1x1x256xf32>
    %cst_29 = arith.constant dense<0.000000e+00> : vector<1xf32>
    %79 = vector.multi_reduction <add>, %78, %cst_29 [1, 2] : vector<1x1x256xf32> to vector<1xf32>
    %80 = vector.shape_cast %79 : vector<1xf32> to vector<1x1x1xf32>
    %81 = vector.extract %80[0, 0, 0] : f32 from vector<1x1x1xf32>
    %c0_i32 = arith.constant 0 : i32
    %82 = arith.cmpi eq, %arg1, %c0_i32 : i32
    %83 = arith.extui %82 : i1 to i32
    %c0_i32_30 = arith.constant 0 : i32
    %84 = arith.cmpi ne, %83, %c0_i32_30 : i32
    scf.if %84 {
      %cst_37 = arith.constant 0.000000e+00 : f32
      %92 = vector.broadcast %cst_37 : f32 to vector<1x128xf32>
      %c0_38 = arith.constant 0 : index
      %c0_39 = arith.constant 0 : index
      %c0_40 = arith.constant 0 : index
      %93 = vector.load %arg7[%c0_38, %c0_39, %c0_40] : memref<1x1x128xf32, #tpu.memory_space<vmem>>, vector<1x1x128xf32>
      %94 = vector.shape_cast %93 : vector<1x1x128xf32> to vector<1x128xf32>
      %95 = vector.shape_cast %92 : vector<1x128xf32> to vector<1x1x128xf32>
      tpu.vector_store %arg7[%c0_38, %c0_39, %c0_40], %95 {strides = array<i32>} : memref<1x1x128xf32, #tpu.memory_space<vmem>>, vector<1x1x128xf32>,
    } else {
    }
    %c0_31 = arith.constant 0 : index
    %c0_32 = arith.constant 0 : index
    %c0_33 = arith.constant 0 : index
    %85 = vector.load %arg7[%c0_31, %c0_32, %c0_33] : memref<1x1x128xf32, #tpu.memory_space<vmem>>, vector<1x1x128xf32>
    %86 = vector.shape_cast %85 : vector<1x1x128xf32> to vector<1x128xf32>
    %87 = vector.broadcast %81 : f32 to vector<1x128xf32>
    %88 = arith.addf %86, %87 : vector<1x128xf32>
    %c0_34 = arith.constant 0 : index
    %c0_35 = arith.constant 0 : index
    %c0_36 = arith.constant 0 : index
    %89 = vector.load %arg7[%c0_34, %c0_35, %c0_36] : memref<1x1x128xf32, #tpu.memory_space<vmem>>, vector<1x1x128xf32>
    %90 = vector.shape_cast %89 : vector<1x1x128xf32> to vector<1x128xf32>
    %91 = vector.shape_cast %88 : vector<1x128xf32> to vector<1x1x128xf32>
    tpu.vector_store %arg7[%c0_34, %c0_35, %c0_36], %91 {strides = array<i32>} : memref<1x1x128xf32, #tpu.memory_space<vmem>>, vector<1x1x128xf32>,
    return
  }
  func.func @transform_0(%arg0: i32, %arg1: i32) -> (i32, i32, i32) {
    %c0_i32 = arith.constant 0 : i32
    %c0_i32_0 = arith.constant 0 : i32
    %c0_i32_1 = arith.constant 0 : i32
    return %arg0, %c0_i32, %c0_i32_0 : i32, i32, i32
  }
  func.func @transform_1(%arg0: i32, %arg1: i32) -> (i32, i32, i32) {
    %c0_i32 = arith.constant 0 : i32
    %c0_i32_0 = arith.constant 0 : i32
    return %arg0, %c0_i32, %arg1 : i32, i32, i32
  }
  func.func @transform_2(%arg0: i32, %arg1: i32) -> (i32, i32, i32) {
    %c0_i32 = arith.constant 0 : i32
    %c0_i32_0 = arith.constant 0 : i32
    return %arg0, %c0_i32, %arg1 : i32, i32, i32
  }
  func.func @transform_3(%arg0: i32, %arg1: i32) -> (i32, i32, i32) {
    %c0_i32 = arith.constant 0 : i32
    %c0_i32_0 = arith.constant 0 : i32
    %c0_i32_1 = arith.constant 0 : i32
    return %arg0, %c0_i32, %c0_i32_0 : i32, i32, i32
  }
  func.func @transform_4(%arg0: i32, %arg1: i32) -> (i32, i32, i32) {
    %c0_i32 = arith.constant 0 : i32
    %c0_i32_0 = arith.constant 0 : i32
    %c0_i32_1 = arith.constant 0 : i32
    return %arg0, %c0_i32, %c0_i32_0 : i32, i32, i32
  }
  func.func @transform_5(%arg0: i32, %arg1: i32) -> (i32, i32, i32) {
    %c0_i32 = arith.constant 0 : i32
    %c0_i32_0 = arith.constant 0 : i32
    %c0_i32_1 = arith.constant 0 : i32
    return %arg0, %c0_i32, %c0_i32_0 : i32, i32, i32
  }
}

</mosaic_0001>

<llo_original>
// kernel: lovasz_hinge_loss.1
$region0: #{lovasz_hinge_loss.1}
  #allocation0 [shape = 'u32[]', space=smem, size = 0x4, offset = 0x4, fixed_abs, tag = 'smem constant byte address 0x4 - core index']
  #allocation1 [shape = 'u32[72,128]{1,0:T(1,128)}', space=vmem, size = 0x9000, scoped, tag = 'internal scratch']
  %s0 = inlined_call_operand.vmem [shape: f32[2,1,256], index: 0, kind: input, shape index: {}, may-alias: {0,2}]
  %s1 = inlined_call_operand.vmem [shape: f32[2,1,256], index: 1, kind: input, shape index: {}]
  %s2 = inlined_call_operand.vmem [shape: f32[2,1,256], index: 2, kind: input, shape index: {}, may-alias: {0,2}]
  %s3 = inlined_call_operand.vmem [shape: f32[2,256,1], index: 3, kind: input, shape index: {}]
  %s4 = inlined_call_operand.vmem [shape: f32[2,256,1], index: 4, kind: input, shape index: {}]
  %s5 = inlined_call_operand.vmem [shape: f32[2,1,128], index: 5, kind: output, shape index: {}]
  %s6 = sld [smem:[#allocation0]]
  $region57: #{lovasz_hinge_loss.1} parent=0
    _
  %s8 = ssub.s32 1, %s6
  %s9 = scalar_select 0, %s8, %s6
  loop: start=0, step=1, limit=4
  $region2: #{lovasz_hinge_loss.1} parent=0 // loop_pre_header
    _
  $region3: #{lovasz_hinge_loss.1} parent=0 // loop_header
    %s11 = sphi 0, %s15
    %p12 = scmp.ge.s32.totalorder %s11, 4
    %s18 = sphi 0, %s30
    %s19 = sphi 0, %s26
    %s20 = sphi 0, %s18
    %s21 = sphi 0, %s19
    %s22 = sphi 0, %s20
    %s23 = sphi 0, %s21
    %s33 = sphi 0, %s35
    %s36 = sphi 0, %s33
    %s37 = sphi 0, %s36
    %s53 = sphi 0, %s37
    %s61 = sphi 0, %s63
    %s64 = sphi 0, %s61
    %s65 = sphi 0, %s64
    %s81 = sphi 0, %s65
    %s89 = sphi 0, %s91
    %s92 = sphi 0, %s89
    %s93 = sphi 0, %s92
    %s109 = sphi 0, %s93
    %s115 = sphi 0, %s117
    %s118 = sphi 0, %s115
    %s119 = sphi 0, %s118
    %s135 = sphi 0, %s119
    %s141 = sphi 0, %s143
    %s144 = sphi 0, %s141
    %s145 = sphi 0, %s144
    %s161 = sphi 0, %s145
    %s167 = sphi 0, %s169
    %s170 = sphi 0, %s167
    %s171 = sphi 0, %s170
    %s187 = sphi 0, %s171
  $region4: #{lovasz_hinge_loss.1} parent=0 // loop_header_branch
    %14 = sbr.rel (%p12) target = $region8
  $region5: #{lovasz_hinge_loss.1} parent=0 // loop_body
    %s16 = ssub.s32 %s11, 1
    %s17 = ssub.s32 %s11, 2
    %s24 = sadd.s32 1, %s19
    %p25 = scmp.ge.s32.totalorder %s24, 1
    %s26 = scalar_select %p25, 0, %s24
    %s27 = sadd.s32 1, %s18
    %s28 = scalar_select %p25, %s27, %s18
    %p29 = scmp.ge.s32.totalorder %s28, 2
    %s30 = scalar_select %p29, 0, %s28
    %s31 = ssub.s32 %s18, %s30
    %p32 = scmp.eq.s32.totalorder %s31, 0
    %s34 = sadd.s32 %s33, 1
    %s35 = scalar_select %p32, %s33, %s34
    %p38 = pneg %p32
    %p39 = scmp.eq.s32.totalorder %s11, 1
    %p40 = por %p38, %p39
    %p41 = scmp.ne.s32.totalorder %s33, %s36
    %p42 = scmp.eq.s32.totalorder %s11, 0
    %p43 = por %p41, %p42
    %p44 = scmp.ne.s32.totalorder %s33, %s36
    %p45 = scmp.eq.s32.totalorder %s16, 1
    %p46 = por %p44, %p45
    %p47 = scmp.ne.s32.totalorder %s36, %s37
    %p48 = scmp.eq.s32.totalorder %s16, 0
    %p49 = por %p47, %p48
    %p50 = scmp.ne.s32.totalorder %s36, %s37
    %p51 = scmp.eq.s32.totalorder %s17, 1
    %p52 = por %p50, %p51
    %p54 = scmp.ne.s32.totalorder %s37, %s53
    %p55 = scmp.eq.s32.totalorder %s17, 0
    %p56 = por %p54, %p55
    %s57 = ssub.s32 %s18, %s30
    %s58 = ssub.s32 %s19, %s26
    %s59 = sor.u32 %s57, %s58
    %p60 = scmp.eq.s32.totalorder %s59, 0
    %s62 = sadd.s32 %s61, 1
    %s63 = scalar_select %p60, %s61, %s62
    %p66 = pneg %p60
    %p67 = scmp.eq.s32.totalorder %s11, 1
    %p68 = por %p66, %p67
    %p69 = scmp.ne.s32.totalorder %s61, %s64
    %p70 = scmp.eq.s32.totalorder %s11, 0
    %p71 = por %p69, %p70
    %p72 = scmp.ne.s32.totalorder %s61, %s64
    %p73 = scmp.eq.s32.totalorder %s16, 1
    %p74 = por %p72, %p73
    %p75 = scmp.ne.s32.totalorder %s64, %s65
    %p76 = scmp.eq.s32.totalorder %s16, 0
    %p77 = por %p75, %p76
    %p78 = scmp.ne.s32.totalorder %s64, %s65
    %p79 = scmp.eq.s32.totalorder %s17, 1
    %p80 = por %p78, %p79
    %p82 = scmp.ne.s32.totalorder %s65, %s81
    %p83 = scmp.eq.s32.totalorder %s17, 0
    %p84 = por %p82, %p83
    %s85 = ssub.s32 %s18, %s30
    %s86 = ssub.s32 %s19, %s26
    %s87 = sor.u32 %s85, %s86
    %p88 = scmp.eq.s32.totalorder %s87, 0
    %s90 = sadd.s32 %s89, 1
    %s91 = scalar_select %p88, %s89, %s90
    %p94 = pneg %p88
    %p95 = scmp.eq.s32.totalorder %s11, 1
    %p96 = por %p94, %p95
    %p97 = scmp.ne.s32.totalorder %s89, %s92
    %p98 = scmp.eq.s32.totalorder %s11, 0
    %p99 = por %p97, %p98
    %p100 = scmp.ne.s32.totalorder %s89, %s92
    %p101 = scmp.eq.s32.totalorder %s16, 1
    %p102 = por %p100, %p101
    %p103 = scmp.ne.s32.totalorder %s92, %s93
    %p104 = scmp.eq.s32.totalorder %s16, 0
    %p105 = por %p103, %p104
    %p106 = scmp.ne.s32.totalorder %s92, %s93
    %p107 = scmp.eq.s32.totalorder %s17, 1
    %p108 = por %p106, %p107
    %p110 = scmp.ne.s32.totalorder %s93, %s109
    %p111 = scmp.eq.s32.totalorder %s17, 0
    %p112 = por %p110, %p111
    %s113 = ssub.s32 %s18, %s30
    %p114 = scmp.eq.s32.totalorder %s113, 0
    %s116 = sadd.s32 %s115, 1
    %s117 = scalar_select %p114, %s115, %s116
    %p120 = pneg %p114
    %p121 = scmp.eq.s32.totalorder %s11, 1
    %p122 = por %p120, %p121
    %p123 = scmp.ne.s32.totalorder %s115, %s118
    %p124 = scmp.eq.s32.totalorder %s11, 0
    %p125 = por %p123, %p124
    %p126 = scmp.ne.s32.totalorder %s115, %s118
    %p127 = scmp.eq.s32.totalorder %s16, 1
    %p128 = por %p126, %p127
    %p129 = scmp.ne.s32.totalorder %s118, %s119
    %p130 = scmp.eq.s32.totalorder %s16, 0
    %p131 = por %p129, %p130
    %p132 = scmp.ne.s32.totalorder %s118, %s119
    %p133 = scmp.eq.s32.totalorder %s17, 1
    %p134 = por %p132, %p133
    %p136 = scmp.ne.s32.totalorder %s119, %s135
    %p137 = scmp.eq.s32.totalorder %s17, 0
    %p138 = por %p136, %p137
    %s139 = ssub.s32 %s18, %s30
    %p140 = scmp.eq.s32.totalorder %s139, 0
    %s142 = sadd.s32 %s141, 1
    %s143 = scalar_select %p140, %s141, %s142
    %p146 = pneg %p140
    %p147 = scmp.eq.s32.totalorder %s11, 1
    %p148 = por %p146, %p147
    %p149 = scmp.ne.s32.totalorder %s141, %s144
    %p150 = scmp.eq.s32.totalorder %s11, 0
    %p151 = por %p149, %p150
    %p152 = scmp.ne.s32.totalorder %s141, %s144
    %p153 = scmp.eq.s32.totalorder %s16, 1
    %p154 = por %p152, %p153
    %p155 = scmp.ne.s32.totalorder %s144, %s145
    %p156 = scmp.eq.s32.totalorder %s16, 0
    %p157 = por %p155, %p156
    %p158 = scmp.ne.s32.totalorder %s144, %s145
    %p159 = scmp.eq.s32.totalorder %s17, 1
    %p160 = por %p158, %p159
    %p162 = scmp.ne.s32.totalorder %s145, %s161
    %p163 = scmp.eq.s32.totalorder %s17, 0
    %p164 = por %p162, %p163
    %s165 = ssub.s32 %s18, %s30
    %p166 = scmp.eq.s32.totalorder %s165, 0
    %s168 = sadd.s32 %s167, 1
    %s169 = scalar_select %p166, %s167, %s168
    %p172 = pneg %p166
    %p173 = scmp.eq.s32.totalorder %s11, 1
    %p174 = por %p172, %p173
    %p175 = scmp.ne.s32.totalorder %s167, %s170
    %p176 = scmp.eq.s32.totalorder %s11, 0
    %p177 = por %p175, %p176
    %p178 = scmp.ne.s32.totalorder %s167, %s170
    %p179 = scmp.eq.s32.totalorder %s16, 1
    %p180 = por %p178, %p179
    %p181 = scmp.ne.s32.totalorder %s170, %s171
    %p182 = scmp.eq.s32.totalorder %s16, 0
    %p183 = por %p181, %p182
    %p184 = scmp.ne.s32.totalorder %s170, %s171
    %p185 = scmp.eq.s32.totalorder %s17, 1
    %p186 = por %p184, %p185
    %p188 = scmp.ne.s32.totalorder %s171, %s187
    %p189 = scmp.eq.s32.totalorder %s17, 0
    %p190 = por %p188, %p189
    %p191 = scmp.le.s32.totalorder 1, %s11
    %p192 = scmp.lt.s32.totalorder %s11, 3
    %p193 = pnand %p191, %p192
    %p194 = pneg %p193
    // Predicated region
    $region9: #{lovasz_hinge_loss.1} parent=5 // pred_check
      _
    $region10: #{lovasz_hinge_loss.1} parent=5 // pred_check_branch
      %196 = sbr.rel (%p193) target = $region12
    $region11: #{lovasz_hinge_loss.1} parent=5 // pred_region
      %s197 = ssub.s32 %s11, 1
    $region12: #{lovasz_hinge_loss.1} parent=5 // pred_fallthru
      _
    %p198 = scmp.lt.s32.totalorder %s11, 2
    // Predicated region
    $region13: #{lovasz_hinge_loss.1} parent=5 // pred_check
      %p199 = pneg %p198
    $region14: #{lovasz_hinge_loss.1} parent=5 // pred_check_branch
      %201 = sbr.rel (%p199) target = $region16
    $region15: #{lovasz_hinge_loss.1} parent=5 // pred_region
      // Predicated region
      $region17: #{lovasz_hinge_loss.1} parent=15 // pred_check
        %p202 = pneg %p43
      $region18: #{lovasz_hinge_loss.1} parent=15 // pred_check_branch
        %204 = sbr.rel (%p202) target = $region20
      $region19: #{lovasz_hinge_loss.1} parent=15 // pred_region
        %p205 = scmp.lt.s32.totalorder %s18, 1
        %s206 = scalar_select %p205, %s18, 1
        %s207 = smul.addr %s206, 2
        %s208 = scalar_lea.vmem %s0, %s207
      $region20: #{lovasz_hinge_loss.1} parent=15 // pred_fallthru
        _
      // Predicated region
      $region21: #{lovasz_hinge_loss.1} parent=15 // pred_check
        %p209 = pneg %p71
      $region22: #{lovasz_hinge_loss.1} parent=15 // pred_check_branch
        %211 = sbr.rel (%p209) target = $region24
      $region23: #{lovasz_hinge_loss.1} parent=15 // pred_region
        %s212 = smul.u32 2, %s19
        %p213 = scmp.lt.s32.totalorder %s18, 1
        %s214 = scalar_select %p213, %s18, 1
        %p215 = scmp.lt.s32.totalorder %s212, 1
        %s216 = scalar_select %p215, %s212, 1
        %s217 = smul.addr %s214, 2
        %s218 = sadd.s32 %s216, %s217
        %s219 = scalar_lea.vmem %s1, %s218
        %s220 = smul.u32 2, %s19
      $region24: #{lovasz_hinge_loss.1} parent=15 // pred_fallthru
        _
      // Predicated region
      $region25: #{lovasz_hinge_loss.1} parent=15 // pred_check
        %p221 = pneg %p99
      $region26: #{lovasz_hinge_loss.1} parent=15 // pred_check_branch
        %223 = sbr.rel (%p221) target = $region28
      $region27: #{lovasz_hinge_loss.1} parent=15 // pred_region
        %s224 = smul.u32 2, %s19
        %p225 = scmp.lt.s32.totalorder %s18, 1
        %s226 = scalar_select %p225, %s18, 1
        %p227 = scmp.lt.s32.totalorder %s224, 1
        %s228 = scalar_select %p227, %s224, 1
        %s229 = smul.addr %s226, 2
        %s230 = sadd.s32 %s228, %s229
        %s231 = scalar_lea.vmem %s2, %s230
        %s232 = smul.u32 2, %s19
      $region28: #{lovasz_hinge_loss.1} parent=15 // pred_fallthru
        _
      // Predicated region
      $region29: #{lovasz_hinge_loss.1} parent=15 // pred_check
        %p233 = pneg %p125
      $region30: #{lovasz_hinge_loss.1} parent=15 // pred_check_branch
        %235 = sbr.rel (%p233) target = $region32
      $region31: #{lovasz_hinge_loss.1} parent=15 // pred_region
        %p236 = scmp.lt.s32.totalorder %s18, 1
        %s237 = scalar_select %p236, %s18, 1
        %s238 = smul.addr %s237, 32
        %s239 = smul.addr %s238, 8
        %s240 = scalar_lea.vmem %s3, %s239
      $region32: #{lovasz_hinge_loss.1} parent=15 // pred_fallthru
        _
      // Predicated region
      $region33: #{lovasz_hinge_loss.1} parent=15 // pred_check
        %p241 = pneg %p151
      $region34: #{lovasz_hinge_loss.1} parent=15 // pred_check_branch
        %243 = sbr.rel (%p241) target = $region36
      $region35: #{lovasz_hinge_loss.1} parent=15 // pred_region
        %p244 = scmp.lt.s32.totalorder %s18, 1
        %s245 = scalar_select %p244, %s18, 1
        %s246 = smul.addr %s245, 32
        %s247 = smul.addr %s246, 8
        %s248 = scalar_lea.vmem %s4, %s247
      $region36: #{lovasz_hinge_loss.1} parent=15 // pred_fallthru
        _
    $region16: #{lovasz_hinge_loss.1} parent=5 // pred_fallthru
      _
    %p249 = scmp.le.s32.totalorder 1, %s11
    %p250 = scmp.lt.s32.totalorder %s11, 3
    %p251 = pnand %p249, %p250
    %p252 = pneg %p251
    // Predicated region
    $region37: #{lovasz_hinge_loss.1} parent=5 // pred_check
      _
    $region38: #{lovasz_hinge_loss.1} parent=5 // pred_check_branch
      %254 = sbr.rel (%p251) target = $region40
    $region39: #{lovasz_hinge_loss.1} parent=5 // pred_region
      %s255 = ssub.s32 %s11, 1
      %p256 = scmp.lt.s32.totalorder %s20, 1
      %s257 = scalar_select %p256, %s20, 1
      %s258 = smul.addr %s257, 2
      %s259 = scalar_lea.vmem %s0, %s258
      %p260 = pneg %p49
      %p261 = pneg %p46
      %s262 = smul.u32 2, %s21
      %p263 = scmp.lt.s32.totalorder %s20, 1
      %s264 = scalar_select %p263, %s20, 1
      %p265 = scmp.lt.s32.totalorder %s262, 1
      %s266 = scalar_select %p265, %s262, 1
      %s267 = smul.addr %s264, 2
      %s268 = sadd.s32 %s266, %s267
      %s269 = scalar_lea.vmem %s1, %s268
      %p270 = pneg %p77
      %p271 = pneg %p74
      %s272 = smul.u32 2, %s21
      %p273 = scmp.lt.s32.totalorder %s20, 1
      %s274 = scalar_select %p273, %s20, 1
      %p275 = scmp.lt.s32.totalorder %s272, 1
      %s276 = scalar_select %p275, %s272, 1
      %s277 = smul.addr %s274, 2
      %s278 = sadd.s32 %s276, %s277
      %s279 = scalar_lea.vmem %s2, %s278
      %p280 = pneg %p105
      %p281 = pneg %p102
      %p282 = scmp.lt.s32.totalorder %s20, 1
      %s283 = scalar_select %p282, %s20, 1
      %s284 = smul.addr %s283, 32
      %s285 = smul.addr %s284, 8
      %s286 = scalar_lea.vmem %s3, %s285
      %p287 = pneg %p131
      %p288 = pneg %p128
      %p289 = scmp.lt.s32.totalorder %s20, 1
      %s290 = scalar_select %p289, %s20, 1
      %s291 = smul.addr %s290, 32
      %s292 = smul.addr %s291, 8
      %s293 = scalar_lea.vmem %s4, %s292
      %p294 = pneg %p157
      %p295 = pneg %p154
      %p296 = pneg %p183
      %p297 = pneg %p180
      %p298 = scmp.lt.s32.totalorder %s20, 1
      %s299 = scalar_select %p298, %s20, 1
      %s300 = scalar_lea.vmem %s5, %s299
      %p301 = scmp.lt.s32.totalorder %s20, 1
      %s302 = scalar_select %p301, %s20, 1
      %s303 = smul.addr %s302, 2
      %s304 = scalar_lea.vmem %s0, %s303
      %s305 = smul.u32 2, %s21
      %p306 = scmp.lt.s32.totalorder %s20, 1
      %s307 = scalar_select %p306, %s20, 1
      %p308 = scmp.lt.s32.totalorder %s305, 1
      %s309 = scalar_select %p308, %s305, 1
      %s310 = smul.addr %s307, 2
      %s311 = sadd.s32 %s309, %s310
      %s312 = scalar_lea.vmem %s1, %s311
      %s313 = smul.u32 2, %s21
      %s314 = smul.u32 2, %s21
      %p315 = scmp.lt.s32.totalorder %s20, 1
      %s316 = scalar_select %p315, %s20, 1
      %p317 = scmp.lt.s32.totalorder %s314, 1
      %s318 = scalar_select %p317, %s314, 1
      %s319 = smul.addr %s316, 2
      %s320 = sadd.s32 %s318, %s319
      %s321 = scalar_lea.vmem %s2, %s320
      %s322 = smul.u32 2, %s21
      %p323 = scmp.lt.s32.totalorder %s20, 1
      %s324 = scalar_select %p323, %s20, 1
      %s325 = smul.addr %s324, 32
      %s326 = smul.addr %s325, 8
      %s327 = scalar_lea.vmem %s3, %s326
      %p328 = scmp.lt.s32.totalorder %s20, 1
      %s329 = scalar_select %p328, %s20, 1
      %s330 = smul.addr %s329, 32
      %s331 = smul.addr %s330, 8
      %s332 = scalar_lea.vmem %s4, %s331
      %p333 = scmp.lt.s32.totalorder %s20, 1
      %s334 = scalar_select %p333, %s20, 1
      %s335 = scalar_lea.vmem %s5, %s334
      %v336 = vld [vmem:[%s304] sm:$0x3]
      %v337 = vld [vmem:[%s312] sm:$0x3]
      %v338 = vld [vmem:[%s321] sm:$0x3]
      %v339 = vld [vmem:[%s327] sm:$0xff]
      %v340 = vld [vmem:[%s327 + $0x8] sm:$0xff]
      %v341 = vld [vmem:[%s327 + $0x10] sm:$0xff]
      %v342 = vld [vmem:[%s327 + $0x18] sm:$0xff]
      %v343 = vld [vmem:[%s327 + $0x20] sm:$0xff]
      %v344 = vld [vmem:[%s327 + $0x28] sm:$0xff]
      %v345 = vld [vmem:[%s327 + $0x30] sm:$0xff]
      %v346 = vld [vmem:[%s327 + $0x38] sm:$0xff]
      %v347 = vld [vmem:[%s327 + $0x40] sm:$0xff]
      %v348 = vld [vmem:[%s327 + $0x48] sm:$0xff]
      %v349 = vld [vmem:[%s327 + $0x50] sm:$0xff]
      %v350 = vld [vmem:[%s327 + $0x58] sm:$0xff]
      %v351 = vld [vmem:[%s327 + $0x60] sm:$0xff]
      %v352 = vld [vmem:[%s327 + $0x68] sm:$0xff]
      %v353 = vld [vmem:[%s327 + $0x70] sm:$0xff]
      %v354 = vld [vmem:[%s327 + $0x78] sm:$0xff]
      %v355 = vld [vmem:[%s327 + $0x80] sm:$0xff]
      %v356 = vld [vmem:[%s327 + $0x88] sm:$0xff]
      %v357 = vld [vmem:[%s327 + $0x90] sm:$0xff]
      %v358 = vld [vmem:[%s327 + $0x98] sm:$0xff]
      %v359 = vld [vmem:[%s327 + $0xa0] sm:$0xff]
      %v360 = vld [vmem:[%s327 + $0xa8] sm:$0xff]
      %v361 = vld [vmem:[%s327 + $0xb0] sm:$0xff]
      %v362 = vld [vmem:[%s327 + $0xb8] sm:$0xff]
      %v363 = vld [vmem:[%s327 + $0xc0] sm:$0xff]
      %v364 = vld [vmem:[%s327 + $0xc8] sm:$0xff]
      %v365 = vld [vmem:[%s327 + $0xd0] sm:$0xff]
      %v366 = vld [vmem:[%s327 + $0xd8] sm:$0xff]
      %v367 = vld [vmem:[%s327 + $0xe0] sm:$0xff]
      %v368 = vld [vmem:[%s327 + $0xe8] sm:$0xff]
      %v369 = vld [vmem:[%s327 + $0xf0] sm:$0xff]
      %v370 = vld [vmem:[%s327 + $0xf8] sm:$0xff]
      %v371 = vld [vmem:[%s332] sm:$0xff]
      %v372 = vld [vmem:[%s332 + $0x8] sm:$0xff]
      %v373 = vld [vmem:[%s332 + $0x10] sm:$0xff]
      %v374 = vld [vmem:[%s332 + $0x18] sm:$0xff]
      %v375 = vld [vmem:[%s332 + $0x20] sm:$0xff]
      %v376 = vld [vmem:[%s332 + $0x28] sm:$0xff]
      %v377 = vld [vmem:[%s332 + $0x30] sm:$0xff]
      %v378 = vld [vmem:[%s332 + $0x38] sm:$0xff]
      %v379 = vld [vmem:[%s332 + $0x40] sm:$0xff]
      %v380 = vld [vmem:[%s332 + $0x48] sm:$0xff]
      %v381 = vld [vmem:[%s332 + $0x50] sm:$0xff]
      %v382 = vld [vmem:[%s332 + $0x58] sm:$0xff]
      %v383 = vld [vmem:[%s332 + $0x60] sm:$0xff]
      %v384 = vld [vmem:[%s332 + $0x68] sm:$0xff]
      %v385 = vld [vmem:[%s332 + $0x70] sm:$0xff]
      %v386 = vld [vmem:[%s332 + $0x78] sm:$0xff]
      %v387 = vld [vmem:[%s332 + $0x80] sm:$0xff]
      %v388 = vld [vmem:[%s332 + $0x88] sm:$0xff]
      %v389 = vld [vmem:[%s332 + $0x90] sm:$0xff]
      %v390 = vld [vmem:[%s332 + $0x98] sm:$0xff]
      %v391 = vld [vmem:[%s332 + $0xa0] sm:$0xff]
      %v392 = vld [vmem:[%s332 + $0xa8] sm:$0xff]
      %v393 = vld [vmem:[%s332 + $0xb0] sm:$0xff]
      %v394 = vld [vmem:[%s332 + $0xb8] sm:$0xff]
      %v395 = vld [vmem:[%s332 + $0xc0] sm:$0xff]
      %v396 = vld [vmem:[%s332 + $0xc8] sm:$0xff]
      %v397 = vld [vmem:[%s332 + $0xd0] sm:$0xff]
      %v398 = vld [vmem:[%s332 + $0xd8] sm:$0xff]
      %v399 = vld [vmem:[%s332 + $0xe0] sm:$0xff]
      %v400 = vld [vmem:[%s332 + $0xe8] sm:$0xff]
      %v401 = vld [vmem:[%s332 + $0xf0] sm:$0xff]
      %v402 = vld [vmem:[%s332 + $0xf8] sm:$0xff]
      %v403 = vmul.f32 %v338, 2.0
      %v404 = vsub.f32 %v403, 1.0
      %v405 = vmul.f32 %v337, %v404
      %v406 = vsub.f32 1.0, %v405
      %v407 = vmul.f32 %v371, 2.0
      %v408 = vmul.f32 %v372, 2.0
      %v409 = vmul.f32 %v373, 2.0
      %v410 = vmul.f32 %v374, 2.0
      %v411 = vmul.f32 %v375, 2.0
      %v412 = vmul.f32 %v376, 2.0
      %v413 = vmul.f32 %v377, 2.0
      %v414 = vmul.f32 %v378, 2.0
      %v415 = vmul.f32 %v379, 2.0
      %v416 = vmul.f32 %v380, 2.0
      %v417 = vmul.f32 %v381, 2.0
      %v418 = vmul.f32 %v382, 2.0
      %v419 = vmul.f32 %v383, 2.0
      %v420 = vmul.f32 %v384, 2.0
      %v421 = vmul.f32 %v385, 2.0
      %v422 = vmul.f32 %v386, 2.0
      %v423 = vmul.f32 %v387, 2.0
      %v424 = vmul.f32 %v388, 2.0
      %v425 = vmul.f32 %v389, 2.0
      %v426 = vmul.f32 %v390, 2.0
      %v427 = vmul.f32 %v391, 2.0
      %v428 = vmul.f32 %v392, 2.0
      %v429 = vmul.f32 %v393, 2.0
      %v430 = vmul.f32 %v394, 2.0
      %v431 = vmul.f32 %v395, 2.0
      %v432 = vmul.f32 %v396, 2.0
      %v433 = vmul.f32 %v397, 2.0
      %v434 = vmul.f32 %v398, 2.0
      %v435 = vmul.f32 %v399, 2.0
      %v436 = vmul.f32 %v400, 2.0
      %v437 = vmul.f32 %v401, 2.0
      %v438 = vmul.f32 %v402, 2.0
      %v439 = vsub.f32 %v407, 1.0
      %v440 = vsub.f32 %v408, 1.0
      %v441 = vsub.f32 %v409, 1.0
      %v442 = vsub.f32 %v410, 1.0
      %v443 = vsub.f32 %v411, 1.0
      %v444 = vsub.f32 %v412, 1.0
      %v445 = vsub.f32 %v413, 1.0
      %v446 = vsub.f32 %v414, 1.0
      %v447 = vsub.f32 %v415, 1.0
      %v448 = vsub.f32 %v416, 1.0
      %v449 = vsub.f32 %v417, 1.0
      %v450 = vsub.f32 %v418, 1.0
      %v451 = vsub.f32 %v419, 1.0
      %v452 = vsub.f32 %v420, 1.0
      %v453 = vsub.f32 %v421, 1.0
      %v454 = vsub.f32 %v422, 1.0
      %v455 = vsub.f32 %v423, 1.0
      %v456 = vsub.f32 %v424, 1.0
      %v457 = vsub.f32 %v425, 1.0
      %v458 = vsub.f32 %v426, 1.0
      %v459 = vsub.f32 %v427, 1.0
      %v460 = vsub.f32 %v428, 1.0
      %v461 = vsub.f32 %v429, 1.0
      %v462 = vsub.f32 %v430, 1.0
      %v463 = vsub.f32 %v431, 1.0
      %v464 = vsub.f32 %v432, 1.0
      %v465 = vsub.f32 %v433, 1.0
      %v466 = vsub.f32 %v434, 1.0
      %v467 = vsub.f32 %v435, 1.0
      %v468 = vsub.f32 %v436, 1.0
      %v469 = vsub.f32 %v437, 1.0
      %v470 = vsub.f32 %v438, 1.0
      %v471 = vmul.f32 %v339, %v439
      %v472 = vmul.f32 %v340, %v440
      %v473 = vmul.f32 %v341, %v441
      %v474 = vmul.f32 %v342, %v442
      %v475 = vmul.f32 %v343, %v443
      %v476 = vmul.f32 %v344, %v444
      %v477 = vmul.f32 %v345, %v445
      %v478 = vmul.f32 %v346, %v446
      %v479 = vmul.f32 %v347, %v447
      %v480 = vmul.f32 %v348, %v448
      %v481 = vmul.f32 %v349, %v449
      %v482 = vmul.f32 %v350, %v450
      %v483 = vmul.f32 %v351, %v451
      %v484 = vmul.f32 %v352, %v452
      %v485 = vmul.f32 %v353, %v453
      %v486 = vmul.f32 %v354, %v454
      %v487 = vmul.f32 %v355, %v455
      %v488 = vmul.f32 %v356, %v456
      %v489 = vmul.f32 %v357, %v457
      %v490 = vmul.f32 %v358, %v458
      %v491 = vmul.f32 %v359, %v459
      %v492 = vmul.f32 %v360, %v460
      %v493 = vmul.f32 %v361, %v461
      %v494 = vmul.f32 %v362, %v462
      %v495 = vmul.f32 %v363, %v463
      %v496 = vmul.f32 %v364, %v464
      %v497 = vmul.f32 %v365, %v465
      %v498 = vmul.f32 %v366, %v466
      %v499 = vmul.f32 %v367, %v467
      %v500 = vmul.f32 %v368, %v468
      %v501 = vmul.f32 %v369, %v469
      %v502 = vmul.f32 %v370, %v470
      %v503 = vsub.f32 1.0, %v471
      %v504 = vsub.f32 1.0, %v472
      %v505 = vsub.f32 1.0, %v473
      %v506 = vsub.f32 1.0, %v474
      %v507 = vsub.f32 1.0, %v475
      %v508 = vsub.f32 1.0, %v476
      %v509 = vsub.f32 1.0, %v477
      %v510 = vsub.f32 1.0, %v478
      %v511 = vsub.f32 1.0, %v479
      %v512 = vsub.f32 1.0, %v480
      %v513 = vsub.f32 1.0, %v481
      %v514 = vsub.f32 1.0, %v482
      %v515 = vsub.f32 1.0, %v483
      %v516 = vsub.f32 1.0, %v484
      %v517 = vsub.f32 1.0, %v485
      %v518 = vsub.f32 1.0, %v486
      %v519 = vsub.f32 1.0, %v487
      %v520 = vsub.f32 1.0, %v488
      %v521 = vsub.f32 1.0, %v489
      %v522 = vsub.f32 1.0, %v490
      %v523 = vsub.f32 1.0, %v491
      %v524 = vsub.f32 1.0, %v492
      %v525 = vsub.f32 1.0, %v493
      %v526 = vsub.f32 1.0, %v494
      %v527 = vsub.f32 1.0, %v495
      %v528 = vsub.f32 1.0, %v496
      %v529 = vsub.f32 1.0, %v497
      %v530 = vsub.f32 1.0, %v498
      %v531 = vsub.f32 1.0, %v499
      %v532 = vsub.f32 1.0, %v500
      %v533 = vsub.f32 1.0, %v501
      %v534 = vsub.f32 1.0, %v502
      %v535 = vlaneseq
      %v536 = vshrl.u32 %v535, 7
      %v537 = vadd.s32 %v536, 8
      %v538 = vadd.s32 %v536, 16
      %v539 = vadd.s32 %v536, 24
      %v540 = vadd.s32 %v536, 32
      %v541 = vadd.s32 %v536, 40
      %v542 = vadd.s32 %v536, 48
      %v543 = vadd.s32 %v536, 56
      %v544 = vadd.s32 %v536, 64
      %v545 = vadd.s32 %v536, 72
      %v546 = vadd.s32 %v536, 80
      %v547 = vadd.s32 %v536, 88
      %v548 = vadd.s32 %v536, 96
      %v549 = vadd.s32 %v536, 104
      %v550 = vadd.s32 %v536, 112
      %v551 = vadd.s32 %v536, 120
      %v552 = vadd.s32 %v536, 128
      %v553 = vadd.s32 %v536, 136
      %v554 = vadd.s32 %v536, 144
      %v555 = vadd.s32 %v536, 152
      %v556 = vadd.s32 %v536, 160
      %v557 = vadd.s32 %v536, 168
      %v558 = vadd.s32 %v536, 176
      %v559 = vadd.s32 %v536, 184
      %v560 = vadd.s32 %v536, 192
      %v561 = vadd.s32 %v536, 200
      %v562 = vadd.s32 %v536, 208
      %v563 = vadd.s32 %v536, 216
      %v564 = vadd.s32 %v536, 224
      %v565 = vadd.s32 %v536, 232
      %v566 = vadd.s32 %v536, 240
      %v567 = vadd.s32 %v536, 248
      %s568 = smul.u32 %s21, 256
      %v569 = vlaneseq
      %v570 = vand.u32 %v569, 127
      %v571 = vadd.s32 %v570, 128
      %v572 = vstv %s568
      %v573 = vadd.s32 %v572, %v570
      %v574 = vadd.s32 %v572, %v571
      %576 = vset.pattern.permute.xlu0 0
      %577 = vperm.xlu0 %576, %v503
      %v578 = vpop.permute.xlu0 %577
      %581 = vset.pattern.permute.xlu0 0
      %582 = vperm.xlu0 %581, %v504
      %v583 = vpop.permute.xlu0 %582
      %586 = vset.pattern.permute.xlu0 0
      %587 = vperm.xlu0 %586, %v505
      %v588 = vpop.permute.xlu0 %587
      %591 = vset.pattern.permute.xlu0 0
      %592 = vperm.xlu0 %591, %v506
      %v593 = vpop.permute.xlu0 %592
      %596 = vset.pattern.permute.xlu0 0
      %597 = vperm.xlu0 %596, %v507
      %v598 = vpop.permute.xlu0 %597
      %601 = vset.pattern.permute.xlu0 0
      %602 = vperm.xlu0 %601, %v508
      %v603 = vpop.permute.xlu0 %602
      %606 = vset.pattern.permute.xlu0 0
      %607 = vperm.xlu0 %606, %v509
      %v608 = vpop.permute.xlu0 %607
      %611 = vset.pattern.permute.xlu0 0
      %612 = vperm.xlu0 %611, %v510
      %v613 = vpop.permute.xlu0 %612
      %616 = vset.pattern.permute.xlu0 0
      %617 = vperm.xlu0 %616, %v511
      %v618 = vpop.permute.xlu0 %617
      %621 = vset.pattern.permute.xlu0 0
      %622 = vperm.xlu0 %621, %v512
      %v623 = vpop.permute.xlu0 %622
      %626 = vset.pattern.permute.xlu0 0
      %627 = vperm.xlu0 %626, %v513
      %v628 = vpop.permute.xlu0 %627
      %631 = vset.pattern.permute.xlu0 0
      %632 = vperm.xlu0 %631, %v514
      %v633 = vpop.permute.xlu0 %632
      %636 = vset.pattern.permute.xlu0 0
      %637 = vperm.xlu0 %636, %v515
      %v638 = vpop.permute.xlu0 %637
      %641 = vset.pattern.permute.xlu0 0
      %642 = vperm.xlu0 %641, %v516
      %v643 = vpop.permute.xlu0 %642
      %646 = vset.pattern.permute.xlu0 0
      %647 = vperm.xlu0 %646, %v517
      %v648 = vpop.permute.xlu0 %647
      %651 = vset.pattern.permute.xlu0 0
      %652 = vperm.xlu0 %651, %v518
      %v653 = vpop.permute.xlu0 %652
      %656 = vset.pattern.permute.xlu0 0
      %657 = vperm.xlu0 %656, %v519
      %v658 = vpop.permute.xlu0 %657
      %661 = vset.pattern.permute.xlu0 0
      %662 = vperm.xlu0 %661, %v520
      %v663 = vpop.permute.xlu0 %662
      %666 = vset.pattern.permute.xlu0 0
      %667 = vperm.xlu0 %666, %v521
      %v668 = vpop.permute.xlu0 %667
      %671 = vset.pattern.permute.xlu0 0
      %672 = vperm.xlu0 %671, %v522
      %v673 = vpop.permute.xlu0 %672
      %676 = vset.pattern.permute.xlu0 0
      %677 = vperm.xlu0 %676, %v523
      %v678 = vpop.permute.xlu0 %677
      %681 = vset.pattern.permute.xlu0 0
      %682 = vperm.xlu0 %681, %v524
      %v683 = vpop.permute.xlu0 %682
      %686 = vset.pattern.permute.xlu0 0
      %687 = vperm.xlu0 %686, %v525
      %v688 = vpop.permute.xlu0 %687
      %691 = vset.pattern.permute.xlu0 0
      %692 = vperm.xlu0 %691, %v526
      %v693 = vpop.permute.xlu0 %692
      %696 = vset.pattern.permute.xlu0 0
      %697 = vperm.xlu0 %696, %v527
      %v698 = vpop.permute.xlu0 %697
      %701 = vset.pattern.permute.xlu0 0
      %702 = vperm.xlu0 %701, %v528
      %v703 = vpop.permute.xlu0 %702
      %706 = vset.pattern.permute.xlu0 0
      %707 = vperm.xlu0 %706, %v529
      %v708 = vpop.permute.xlu0 %707
      %711 = vset.pattern.permute.xlu0 0
      %712 = vperm.xlu0 %711, %v530
      %v713 = vpop.permute.xlu0 %712
      %716 = vset.pattern.permute.xlu0 0
      %717 = vperm.xlu0 %716, %v531
      %v718 = vpop.permute.xlu0 %717
      %721 = vset.pattern.permute.xlu0 0
      %722 = vperm.xlu0 %721, %v532
      %v723 = vpop.permute.xlu0 %722
      %726 = vset.pattern.permute.xlu0 0
      %727 = vperm.xlu0 %726, %v533
      %v728 = vpop.permute.xlu0 %727
      %731 = vset.pattern.permute.xlu0 0
      %732 = vperm.xlu0 %731, %v534
      %v733 = vpop.permute.xlu0 %732
      %v736 = vperm.slane %v406, 0
      %v737 = vperm.slane %v406, 1
      %vm740 = vcmp.gt.f32.partialorder %v578, %v736
      %vm741 = vcmp.gt.f32.partialorder %v578, %v737
      %vm742 = vcmp.gt.f32.partialorder %v583, %v736
      %vm743 = vcmp.gt.f32.partialorder %v583, %v737
      %vm744 = vcmp.gt.f32.partialorder %v588, %v736
      %vm745 = vcmp.gt.f32.partialorder %v588, %v737
      %vm746 = vcmp.gt.f32.partialorder %v593, %v736
      %vm747 = vcmp.gt.f32.partialorder %v593, %v737
      %vm748 = vcmp.gt.f32.partialorder %v598, %v736
      %vm749 = vcmp.gt.f32.partialorder %v598, %v737
      %vm750 = vcmp.gt.f32.partialorder %v603, %v736
      %vm751 = vcmp.gt.f32.partialorder %v603, %v737
      %vm752 = vcmp.gt.f32.partialorder %v608, %v736
      %vm753 = vcmp.gt.f32.partialorder %v608, %v737
      %vm754 = vcmp.gt.f32.partialorder %v613, %v736
      %vm755 = vcmp.gt.f32.partialorder %v613, %v737
      %vm756 = vcmp.gt.f32.partialorder %v618, %v736
      %vm757 = vcmp.gt.f32.partialorder %v618, %v737
      %vm758 = vcmp.gt.f32.partialorder %v623, %v736
      %vm759 = vcmp.gt.f32.partialorder %v623, %v737
      %vm760 = vcmp.gt.f32.partialorder %v628, %v736
      %vm761 = vcmp.gt.f32.partialorder %v628, %v737
      %vm762 = vcmp.gt.f32.partialorder %v633, %v736
      %vm763 = vcmp.gt.f32.partialorder %v633, %v737
      %vm764 = vcmp.gt.f32.partialorder %v638, %v736
      %vm765 = vcmp.gt.f32.partialorder %v638, %v737
      %vm766 = vcmp.gt.f32.partialorder %v643, %v736
      %vm767 = vcmp.gt.f32.partialorder %v643, %v737
      %vm768 = vcmp.gt.f32.partialorder %v648, %v736
      %vm769 = vcmp.gt.f32.partialorder %v648, %v737
      %vm770 = vcmp.gt.f32.partialorder %v653, %v736
      %vm771 = vcmp.gt.f32.partialorder %v653, %v737
      %vm772 = vcmp.gt.f32.partialorder %v658, %v736
      %vm773 = vcmp.gt.f32.partialorder %v658, %v737
      %vm774 = vcmp.gt.f32.partialorder %v663, %v736
      %vm775 = vcmp.gt.f32.partialorder %v663, %v737
      %vm776 = vcmp.gt.f32.partialorder %v668, %v736
      %vm777 = vcmp.gt.f32.partialorder %v668, %v737
      %vm778 = vcmp.gt.f32.partialorder %v673, %v736
      %vm779 = vcmp.gt.f32.partialorder %v673, %v737
      %vm780 = vcmp.gt.f32.partialorder %v678, %v736
      %vm781 = vcmp.gt.f32.partialorder %v678, %v737
      %vm782 = vcmp.gt.f32.partialorder %v683, %v736
      %vm783 = vcmp.gt.f32.partialorder %v683, %v737
      %vm784 = vcmp.gt.f32.partialorder %v688, %v736
      %vm785 = vcmp.gt.f32.partialorder %v688, %v737
      %vm786 = vcmp.gt.f32.partialorder %v693, %v736
      %vm787 = vcmp.gt.f32.partialorder %v693, %v737
      %vm788 = vcmp.gt.f32.partialorder %v698, %v736
      %vm789 = vcmp.gt.f32.partialorder %v698, %v737
      %vm790 = vcmp.gt.f32.partialorder %v703, %v736
      %vm791 = vcmp.gt.f32.partialorder %v703, %v737
      %vm792 = vcmp.gt.f32.partialorder %v708, %v736
      %vm793 = vcmp.gt.f32.partialorder %v708, %v737
      %vm794 = vcmp.gt.f32.partialorder %v713, %v736
      %vm795 = vcmp.gt.f32.partialorder %v713, %v737
      %vm796 = vcmp.gt.f32.partialorder %v718, %v736
      %vm797 = vcmp.gt.f32.partialorder %v718, %v737
      %vm798 = vcmp.gt.f32.partialorder %v723, %v736
      %vm799 = vcmp.gt.f32.partialorder %v723, %v737
      %vm800 = vcmp.gt.f32.partialorder %v728, %v736
      %vm801 = vcmp.gt.f32.partialorder %v728, %v737
      %vm802 = vcmp.gt.f32.partialorder %v733, %v736
      %vm803 = vcmp.gt.f32.partialorder %v733, %v737
      %vm804 = vcmp.eq.f32.partialorder %v578, %v736
      %vm805 = vcmp.eq.f32.partialorder %v578, %v737
      %vm806 = vcmp.eq.f32.partialorder %v583, %v736
      %vm807 = vcmp.eq.f32.partialorder %v583, %v737
      %vm808 = vcmp.eq.f32.partialorder %v588, %v736
      %vm809 = vcmp.eq.f32.partialorder %v588, %v737
      %vm810 = vcmp.eq.f32.partialorder %v593, %v736
      %vm811 = vcmp.eq.f32.partialorder %v593, %v737
      %vm812 = vcmp.eq.f32.partialorder %v598, %v736
      %vm813 = vcmp.eq.f32.partialorder %v598, %v737
      %vm814 = vcmp.eq.f32.partialorder %v603, %v736
      %vm815 = vcmp.eq.f32.partialorder %v603, %v737
      %vm816 = vcmp.eq.f32.partialorder %v608, %v736
      %vm817 = vcmp.eq.f32.partialorder %v608, %v737
      %vm818 = vcmp.eq.f32.partialorder %v613, %v736
      %vm819 = vcmp.eq.f32.partialorder %v613, %v737
      %vm820 = vcmp.eq.f32.partialorder %v618, %v736
      %vm821 = vcmp.eq.f32.partialorder %v618, %v737
      %vm822 = vcmp.eq.f32.partialorder %v623, %v736
      %vm823 = vcmp.eq.f32.partialorder %v623, %v737
      %vm824 = vcmp.eq.f32.partialorder %v628, %v736
      %vm825 = vcmp.eq.f32.partialorder %v628, %v737
      %vm826 = vcmp.eq.f32.partialorder %v633, %v736
      %vm827 = vcmp.eq.f32.partialorder %v633, %v737
      %vm828 = vcmp.eq.f32.partialorder %v638, %v736
      %vm829 = vcmp.eq.f32.partialorder %v638, %v737
      %vm830 = vcmp.eq.f32.partialorder %v643, %v736
      %vm831 = vcmp.eq.f32.partialorder %v643, %v737
      %vm832 = vcmp.eq.f32.partialorder %v648, %v736
      %vm833 = vcmp.eq.f32.partialorder %v648, %v737
      %vm834 = vcmp.eq.f32.partialorder %v653, %v736
      %vm835 = vcmp.eq.f32.partialorder %v653, %v737
      %vm836 = vcmp.eq.f32.partialorder %v658, %v736
      %vm837 = vcmp.eq.f32.partialorder %v658, %v737
      %vm838 = vcmp.eq.f32.partialorder %v663, %v736
      %vm839 = vcmp.eq.f32.partialorder %v663, %v737
      %vm840 = vcmp.eq.f32.partialorder %v668, %v736
      %vm841 = vcmp.eq.f32.partialorder %v668, %v737
      %vm842 = vcmp.eq.f32.partialorder %v673, %v736
      %vm843 = vcmp.eq.f32.partialorder %v673, %v737
      %vm844 = vcmp.eq.f32.partialorder %v678, %v736
      %vm845 = vcmp.eq.f32.partialorder %v678, %v737
      %vm846 = vcmp.eq.f32.partialorder %v683, %v736
      %vm847 = vcmp.eq.f32.partialorder %v683, %v737
      %vm848 = vcmp.eq.f32.partialorder %v688, %v736
      %vm849 = vcmp.eq.f32.partialorder %v688, %v737
      %vm850 = vcmp.eq.f32.partialorder %v693, %v736
      %vm851 = vcmp.eq.f32.partialorder %v693, %v737
      %vm852 = vcmp.eq.f32.partialorder %v698, %v736
      %vm853 = vcmp.eq.f32.partialorder %v698, %v737
      %vm854 = vcmp.eq.f32.partialorder %v703, %v736
      %vm855 = vcmp.eq.f32.partialorder %v703, %v737
      %vm856 = vcmp.eq.f32.partialorder %v708, %v736
      %vm857 = vcmp.eq.f32.partialorder %v708, %v737
      %vm858 = vcmp.eq.f32.partialorder %v713, %v736
      %vm859 = vcmp.eq.f32.partialorder %v713, %v737
      %vm860 = vcmp.eq.f32.partialorder %v718, %v736
      %vm861 = vcmp.eq.f32.partialorder %v718, %v737
      %vm862 = vcmp.eq.f32.partialorder %v723, %v736
      %vm863 = vcmp.eq.f32.partialorder %v723, %v737
      %vm864 = vcmp.eq.f32.partialorder %v728, %v736
      %vm865 = vcmp.eq.f32.partialorder %v728, %v737
      %vm866 = vcmp.eq.f32.partialorder %v733, %v736
      %vm867 = vcmp.eq.f32.partialorder %v733, %v737
      %vm868 = vcmp.lt.s32.totalorder %v536, %v573
      %vm869 = vcmp.lt.s32.totalorder %v536, %v574
      %vm870 = vcmp.lt.s32.totalorder %v537, %v573
      %vm871 = vcmp.lt.s32.totalorder %v537, %v574
      %vm872 = vcmp.lt.s32.totalorder %v538, %v573
      %vm873 = vcmp.lt.s32.totalorder %v538, %v574
      %vm874 = vcmp.lt.s32.totalorder %v539, %v573
      %vm875 = vcmp.lt.s32.totalorder %v539, %v574
      %vm876 = vcmp.lt.s32.totalorder %v540, %v573
      %vm877 = vcmp.lt.s32.totalorder %v540, %v574
      %vm878 = vcmp.lt.s32.totalorder %v541, %v573
      %vm879 = vcmp.lt.s32.totalorder %v541, %v574
      %vm880 = vcmp.lt.s32.totalorder %v542, %v573
      %vm881 = vcmp.lt.s32.totalorder %v542, %v574
      %vm882 = vcmp.lt.s32.totalorder %v543, %v573
      %vm883 = vcmp.lt.s32.totalorder %v543, %v574
      %vm884 = vcmp.lt.s32.totalorder %v544, %v573
      %vm885 = vcmp.lt.s32.totalorder %v544, %v574
      %vm886 = vcmp.lt.s32.totalorder %v545, %v573
      %vm887 = vcmp.lt.s32.totalorder %v545, %v574
      %vm888 = vcmp.lt.s32.totalorder %v546, %v573
      %vm889 = vcmp.lt.s32.totalorder %v546, %v574
      %vm890 = vcmp.lt.s32.totalorder %v547, %v573
      %vm891 = vcmp.lt.s32.totalorder %v547, %v574
      %vm892 = vcmp.lt.s32.totalorder %v548, %v573
      %vm893 = vcmp.lt.s32.totalorder %v548, %v574
      %vm894 = vcmp.lt.s32.totalorder %v549, %v573
      %vm895 = vcmp.lt.s32.totalorder %v549, %v574
      %vm896 = vcmp.lt.s32.totalorder %v550, %v573
      %vm897 = vcmp.lt.s32.totalorder %v550, %v574
      %vm898 = vcmp.lt.s32.totalorder %v551, %v573
      %vm899 = vcmp.lt.s32.totalorder %v551, %v574
      %vm900 = vcmp.lt.s32.totalorder %v552, %v573
      %vm901 = vcmp.lt.s32.totalorder %v552, %v574
      %vm902 = vcmp.lt.s32.totalorder %v553, %v573
      %vm903 = vcmp.lt.s32.totalorder %v553, %v574
      %vm904 = vcmp.lt.s32.totalorder %v554, %v573
      %vm905 = vcmp.lt.s32.totalorder %v554, %v574
      %vm906 = vcmp.lt.s32.totalorder %v555, %v573
      %vm907 = vcmp.lt.s32.totalorder %v555, %v574
      %vm908 = vcmp.lt.s32.totalorder %v556, %v573
      %vm909 = vcmp.lt.s32.totalorder %v556, %v574
      %vm910 = vcmp.lt.s32.totalorder %v557, %v573
      %vm911 = vcmp.lt.s32.totalorder %v557, %v574
      %vm912 = vcmp.lt.s32.totalorder %v558, %v573
      %vm913 = vcmp.lt.s32.totalorder %v558, %v574
      %vm914 = vcmp.lt.s32.totalorder %v559, %v573
      %vm915 = vcmp.lt.s32.totalorder %v559, %v574
      %vm916 = vcmp.lt.s32.totalorder %v560, %v573
      %vm917 = vcmp.lt.s32.totalorder %v560, %v574
      %vm918 = vcmp.lt.s32.totalorder %v561, %v573
      %vm919 = vcmp.lt.s32.totalorder %v561, %v574
      %vm920 = vcmp.lt.s32.totalorder %v562, %v573
      %vm921 = vcmp.lt.s32.totalorder %v562, %v574
      %vm922 = vcmp.lt.s32.totalorder %v563, %v573
      %vm923 = vcmp.lt.s32.totalorder %v563, %v574
      %vm924 = vcmp.lt.s32.totalorder %v564, %v573
      %vm925 = vcmp.lt.s32.totalorder %v564, %v574
      %vm926 = vcmp.lt.s32.totalorder %v565, %v573
      %vm927 = vcmp.lt.s32.totalorder %v565, %v574
      %vm928 = vcmp.lt.s32.totalorder %v566, %v573
      %vm929 = vcmp.lt.s32.totalorder %v566, %v574
      %vm930 = vcmp.lt.s32.totalorder %v567, %v573
      %vm931 = vcmp.lt.s32.totalorder %v567, %v574
      %vm932 = vmand %vm804, %vm868
      %vm933 = vmand %vm805, %vm869
      %vm934 = vmand %vm806, %vm870
      %vm935 = vmand %vm807, %vm871
      %vm936 = vmand %vm808, %vm872
      %vm937 = vmand %vm809, %vm873
      %vm938 = vmand %vm810, %vm874
      %vm939 = vmand %vm811, %vm875
      %vm940 = vmand %vm812, %vm876
      %vm941 = vmand %vm813, %vm877
      %vm942 = vmand %vm814, %vm878
      %vm943 = vmand %vm815, %vm879
      %vm944 = vmand %vm816, %vm880
      %vm945 = vmand %vm817, %vm881
      %vm946 = vmand %vm818, %vm882
      %vm947 = vmand %vm819, %vm883
      %vm948 = vmand %vm820, %vm884
      %vm949 = vmand %vm821, %vm885
      %vm950 = vmand %vm822, %vm886
      %vm951 = vmand %vm823, %vm887
      %vm952 = vmand %vm824, %vm888
      %vm953 = vmand %vm825, %vm889
      %vm954 = vmand %vm826, %vm890
      %vm955 = vmand %vm827, %vm891
      %vm956 = vmand %vm828, %vm892
      %vm957 = vmand %vm829, %vm893
      %vm958 = vmand %vm830, %vm894
      %vm959 = vmand %vm831, %vm895
      %vm960 = vmand %vm832, %vm896
      %vm961 = vmand %vm833, %vm897
      %vm962 = vmand %vm834, %vm898
      %vm963 = vmand %vm835, %vm899
      %vm964 = vmand %vm836, %vm900
      %vm965 = vmand %vm837, %vm901
      %vm966 = vmand %vm838, %vm902
      %vm967 = vmand %vm839, %vm903
      %vm968 = vmand %vm840, %vm904
      %vm969 = vmand %vm841, %vm905
      %vm970 = vmand %vm842, %vm906
      %vm971 = vmand %vm843, %vm907
      %vm972 = vmand %vm844, %vm908
      %vm973 = vmand %vm845, %vm909
      %vm974 = vmand %vm846, %vm910
      %vm975 = vmand %vm847, %vm911
      %vm976 = vmand %vm848, %vm912
      %vm977 = vmand %vm849, %vm913
      %vm978 = vmand %vm850, %vm914
      %vm979 = vmand %vm851, %vm915
      %vm980 = vmand %vm852, %vm916
      %vm981 = vmand %vm853, %vm917
      %vm982 = vmand %vm854, %vm918
      %vm983 = vmand %vm855, %vm919
      %vm984 = vmand %vm856, %vm920
      %vm985 = vmand %vm857, %vm921
      %vm986 = vmand %vm858, %vm922
      %vm987 = vmand %vm859, %vm923
      %vm988 = vmand %vm860, %vm924
      %vm989 = vmand %vm861, %vm925
      %vm990 = vmand %vm862, %vm926
      %vm991 = vmand %vm863, %vm927
      %vm992 = vmand %vm864, %vm928
      %vm993 = vmand %vm865, %vm929
      %vm994 = vmand %vm866, %vm930
      %vm995 = vmand %vm867, %vm931
      %vm996 = vmor %vm740, %vm932
      %vm997 = vmor %vm741, %vm933
      %vm998 = vmor %vm742, %vm934
      %vm999 = vmor %vm743, %vm935
      %vm1000 = vmor %vm744, %vm936
      %vm1001 = vmor %vm745, %vm937
      %vm1002 = vmor %vm746, %vm938
      %vm1003 = vmor %vm747, %vm939
      %vm1004 = vmor %vm748, %vm940
      %vm1005 = vmor %vm749, %vm941
      %vm1006 = vmor %vm750, %vm942
      %vm1007 = vmor %vm751, %vm943
      %vm1008 = vmor %vm752, %vm944
      %vm1009 = vmor %vm753, %vm945
      %vm1010 = vmor %vm754, %vm946
      %vm1011 = vmor %vm755, %vm947
      %vm1012 = vmor %vm756, %vm948
      %vm1013 = vmor %vm757, %vm949
      %vm1014 = vmor %vm758, %vm950
      %vm1015 = vmor %vm759, %vm951
      %vm1016 = vmor %vm760, %vm952
      %vm1017 = vmor %vm761, %vm953
      %vm1018 = vmor %vm762, %vm954
      %vm1019 = vmor %vm763, %vm955
      %vm1020 = vmor %vm764, %vm956
      %vm1021 = vmor %vm765, %vm957
      %vm1022 = vmor %vm766, %vm958
      %vm1023 = vmor %vm767, %vm959
      %vm1024 = vmor %vm768, %vm960
      %vm1025 = vmor %vm769, %vm961
      %vm1026 = vmor %vm770, %vm962
      %vm1027 = vmor %vm771, %vm963
      %vm1028 = vmor %vm772, %vm964
      %vm1029 = vmor %vm773, %vm965
      %vm1030 = vmor %vm774, %vm966
      %vm1031 = vmor %vm775, %vm967
      %vm1032 = vmor %vm776, %vm968
      %vm1033 = vmor %vm777, %vm969
      %vm1034 = vmor %vm778, %vm970
      %vm1035 = vmor %vm779, %vm971
      %vm1036 = vmor %vm780, %vm972
      %vm1037 = vmor %vm781, %vm973
      %vm1038 = vmor %vm782, %vm974
      %vm1039 = vmor %vm783, %vm975
      %vm1040 = vmor %vm784, %vm976
      %vm1041 = vmor %vm785, %vm977
      %vm1042 = vmor %vm786, %vm978
      %vm1043 = vmor %vm787, %vm979
      %vm1044 = vmor %vm788, %vm980
      %vm1045 = vmor %vm789, %vm981
      %vm1046 = vmor %vm790, %vm982
      %vm1047 = vmor %vm791, %vm983
      %vm1048 = vmor %vm792, %vm984
      %vm1049 = vmor %vm793, %vm985
      %vm1050 = vmor %vm794, %vm986
      %vm1051 = vmor %vm795, %vm987
      %vm1052 = vmor %vm796, %vm988
      %vm1053 = vmor %vm797, %vm989
      %vm1054 = vmor %vm798, %vm990
      %vm1055 = vmor %vm799, %vm991
      %vm1056 = vmor %vm800, %vm992
      %vm1057 = vmor %vm801, %vm993
      %vm1058 = vmor %vm802, %vm994
      %vm1059 = vmor %vm803, %vm995
      %v1060 = vsel %vm996, 1, 0
      %v1061 = vsel %vm997, 1, 0
      %v1062 = vsel %vm998, 1, 0
      %v1063 = vsel %vm999, 1, 0
      %v1064 = vsel %vm1000, 1, 0
      %v1065 = vsel %vm1001, 1, 0
      %v1066 = vsel %vm1002, 1, 0
      %v1067 = vsel %vm1003, 1, 0
      %v1068 = vsel %vm1004, 1, 0
      %v1069 = vsel %vm1005, 1, 0
      %v1070 = vsel %vm1006, 1, 0
      %v1071 = vsel %vm1007, 1, 0
      %v1072 = vsel %vm1008, 1, 0
      %v1073 = vsel %vm1009, 1, 0
      %v1074 = vsel %vm1010, 1, 0
      %v1075 = vsel %vm1011, 1, 0
      %v1076 = vsel %vm1012, 1, 0
      %v1077 = vsel %vm1013, 1, 0
      %v1078 = vsel %vm1014, 1, 0
      %v1079 = vsel %vm1015, 1, 0
      %v1080 = vsel %vm1016, 1, 0
      %v1081 = vsel %vm1017, 1, 0
      %v1082 = vsel %vm1018, 1, 0
      %v1083 = vsel %vm1019, 1, 0
      %v1084 = vsel %vm1020, 1, 0
      %v1085 = vsel %vm1021, 1, 0
      %v1086 = vsel %vm1022, 1, 0
      %v1087 = vsel %vm1023, 1, 0
      %v1088 = vsel %vm1024, 1, 0
      %v1089 = vsel %vm1025, 1, 0
      %v1090 = vsel %vm1026, 1, 0
      %v1091 = vsel %vm1027, 1, 0
      %v1092 = vsel %vm1028, 1, 0
      %v1093 = vsel %vm1029, 1, 0
      %v1094 = vsel %vm1030, 1, 0
      %v1095 = vsel %vm1031, 1, 0
      %v1096 = vsel %vm1032, 1, 0
      %v1097 = vsel %vm1033, 1, 0
      %v1098 = vsel %vm1034, 1, 0
      %v1099 = vsel %vm1035, 1, 0
      %v1100 = vsel %vm1036, 1, 0
      %v1101 = vsel %vm1037, 1, 0
      %v1102 = vsel %vm1038, 1, 0
      %v1103 = vsel %vm1039, 1, 0
      %v1104 = vsel %vm1040, 1, 0
      %v1105 = vsel %vm1041, 1, 0
      %v1106 = vsel %vm1042, 1, 0
      %v1107 = vsel %vm1043, 1, 0
      %v1108 = vsel %vm1044, 1, 0
      %v1109 = vsel %vm1045, 1, 0
      %v1110 = vsel %vm1046, 1, 0
      %v1111 = vsel %vm1047, 1, 0
      %v1112 = vsel %vm1048, 1, 0
      %v1113 = vsel %vm1049, 1, 0
      %v1114 = vsel %vm1050, 1, 0
      %v1115 = vsel %vm1051, 1, 0
      %v1116 = vsel %vm1052, 1, 0
      %v1117 = vsel %vm1053, 1, 0
      %v1118 = vsel %vm1054, 1, 0
      %v1119 = vsel %vm1055, 1, 0
      %v1120 = vsel %vm1056, 1, 0
      %v1121 = vsel %vm1057, 1, 0
      %v1122 = vsel %vm1058, 1, 0
      %v1123 = vsel %vm1059, 1, 0
      %v1124 = vcvt.s32.f32 %v1060
      %v1125 = vcvt.s32.f32 %v1061
      %v1126 = vcvt.s32.f32 %v1062
      %v1127 = vcvt.s32.f32 %v1063
      %v1128 = vcvt.s32.f32 %v1064
      %v1129 = vcvt.s32.f32 %v1065
      %v1130 = vcvt.s32.f32 %v1066
      %v1131 = vcvt.s32.f32 %v1067
      %v1132 = vcvt.s32.f32 %v1068
      %v1133 = vcvt.s32.f32 %v1069
      %v1134 = vcvt.s32.f32 %v1070
      %v1135 = vcvt.s32.f32 %v1071
      %v1136 = vcvt.s32.f32 %v1072
      %v1137 = vcvt.s32.f32 %v1073
      %v1138 = vcvt.s32.f32 %v1074
      %v1139 = vcvt.s32.f32 %v1075
      %v1140 = vcvt.s32.f32 %v1076
      %v1141 = vcvt.s32.f32 %v1077
      %v1142 = vcvt.s32.f32 %v1078
      %v1143 = vcvt.s32.f32 %v1079
      %v1144 = vcvt.s32.f32 %v1080
      %v1145 = vcvt.s32.f32 %v1081
      %v1146 = vcvt.s32.f32 %v1082
      %v1147 = vcvt.s32.f32 %v1083
      %v1148 = vcvt.s32.f32 %v1084
      %v1149 = vcvt.s32.f32 %v1085
      %v1150 = vcvt.s32.f32 %v1086
      %v1151 = vcvt.s32.f32 %v1087
      %v1152 = vcvt.s32.f32 %v1088
      %v1153 = vcvt.s32.f32 %v1089
      %v1154 = vcvt.s32.f32 %v1090
      %v1155 = vcvt.s32.f32 %v1091
      %v1156 = vcvt.s32.f32 %v1092
      %v1157 = vcvt.s32.f32 %v1093
      %v1158 = vcvt.s32.f32 %v1094
      %v1159 = vcvt.s32.f32 %v1095
      %v1160 = vcvt.s32.f32 %v1096
      %v1161 = vcvt.s32.f32 %v1097
      %v1162 = vcvt.s32.f32 %v1098
      %v1163 = vcvt.s32.f32 %v1099
      %v1164 = vcvt.s32.f32 %v1100
      %v1165 = vcvt.s32.f32 %v1101
      %v1166 = vcvt.s32.f32 %v1102
      %v1167 = vcvt.s32.f32 %v1103
      %v1168 = vcvt.s32.f32 %v1104
      %v1169 = vcvt.s32.f32 %v1105
      %v1170 = vcvt.s32.f32 %v1106
      %v1171 = vcvt.s32.f32 %v1107
      %v1172 = vcvt.s32.f32 %v1108
      %v1173 = vcvt.s32.f32 %v1109
      %v1174 = vcvt.s32.f32 %v1110
      %v1175 = vcvt.s32.f32 %v1111
      %v1176 = vcvt.s32.f32 %v1112
      %v1177 = vcvt.s32.f32 %v1113
      %v1178 = vcvt.s32.f32 %v1114
      %v1179 = vcvt.s32.f32 %v1115
      %v1180 = vcvt.s32.f32 %v1116
      %v1181 = vcvt.s32.f32 %v1117
      %v1182 = vcvt.s32.f32 %v1118
      %v1183 = vcvt.s32.f32 %v1119
      %v1184 = vcvt.s32.f32 %v1120
      %v1185 = vcvt.s32.f32 %v1121
      %v1186 = vcvt.s32.f32 %v1122
      %v1187 = vcvt.s32.f32 %v1123
      %v1189 = vperm.slane %v336, 0
      %v1190 = vperm.slane %v336, 1
      %vm1193 = vcmask 1040384
      %v1194 = vsel %vm1193, 1.0, %v1189
      %v1195 = vsel %vm1193, 1.0, %v1190
      %1196 = vmatpush.msra.mxu0 %v1154
      %1197 = vmatpush.msra.mxu0 %v1152
      %1198 = vmatpush.msra.mxu0 %v1150
      %1199 = vmatpush.msra.mxu0 %v1148
      %1200 = vmatpush.msra.mxu0 %v1146
      %1201 = vmatpush.msra.mxu0 %v1144
      %1202 = vmatpush.msra.mxu0 %v1142
      %1203 = vmatpush.msra.mxu0 %v1140
      %1204 = vmatpush.msra.mxu0 %v1138
      %1205 = vmatpush.msra.mxu0 %v1136
      %1206 = vmatpush.msra.mxu0 %v1134
      %1207 = vmatpush.msra.mxu0 %v1132
      %1208 = vmatpush.msra.mxu0 %v1130
      %1209 = vmatpush.msra.mxu0 %v1128
      %1210 = vmatpush.msra.mxu0 %v1126
      %1211 = vmatpush.msra.mxu0 %v1124
      %1212 = vmatmul.f32.gmra.mxu0 %v1194
      %v1213 = vpop.f32.mrf.mxu0
      %v1214 = vadd.f32 0.0, %v1213
      %1215 = vdwg.mxu0
      %1216 = vmatpush.msra.mxu0 %v1186
      %1217 = vmatpush.msra.mxu0 %v1184
      %1218 = vmatpush.msra.mxu0 %v1182
      %1219 = vmatpush.msra.mxu0 %v1180
      %1220 = vmatpush.msra.mxu0 %v1178
      %1221 = vmatpush.msra.mxu0 %v1176
      %1222 = vmatpush.msra.mxu0 %v1174
      %1223 = vmatpush.msra.mxu0 %v1172
      %1224 = vmatpush.msra.mxu0 %v1170
      %1225 = vmatpush.msra.mxu0 %v1168
      %1226 = vmatpush.msra.mxu0 %v1166
      %1227 = vmatpush.msra.mxu0 %v1164
      %1228 = vmatpush.msra.mxu0 %v1162
      %1229 = vmatpush.msra.mxu0 %v1160
      %1230 = vmatpush.msra.mxu0 %v1158
      %1231 = vmatpush.msra.mxu0 %v1156
      %1232 = vmatmul.f32.gmra.mxu0 %v1195
      %v1233 = vpop.f32.mrf.mxu0
      %v1234 = vadd.f32 %v1214, %v1233
      %1235 = vdwg.mxu0
      %1236 = vmatpush.msra.mxu0 %v1155
      %1237 = vmatpush.msra.mxu0 %v1153
      %1238 = vmatpush.msra.mxu0 %v1151
      %1239 = vmatpush.msra.mxu0 %v1149
      %1240 = vmatpush.msra.mxu0 %v1147
      %1241 = vmatpush.msra.mxu0 %v1145
      %1242 = vmatpush.msra.mxu0 %v1143
      %1243 = vmatpush.msra.mxu0 %v1141
      %1244 = vmatpush.msra.mxu0 %v1139
      %1245 = vmatpush.msra.mxu0 %v1137
      %1246 = vmatpush.msra.mxu0 %v1135
      %1247 = vmatpush.msra.mxu0 %v1133
      %1248 = vmatpush.msra.mxu0 %v1131
      %1249 = vmatpush.msra.mxu0 %v1129
      %1250 = vmatpush.msra.mxu0 %v1127
      %1251 = vmatpush.msra.mxu0 %v1125
      %1252 = vmatmul.f32.gmra.mxu0 %v1194
      %v1253 = vpop.f32.mrf.mxu0
      %v1254 = vadd.f32 0.0, %v1253
      %1255 = vdwg.mxu0
      %1256 = vmatpush.msra.mxu0 %v1187
      %1257 = vmatpush.msra.mxu0 %v1185
      %1258 = vmatpush.msra.mxu0 %v1183
      %1259 = vmatpush.msra.mxu0 %v1181
      %1260 = vmatpush.msra.mxu0 %v1179
      %1261 = vmatpush.msra.mxu0 %v1177
      %1262 = vmatpush.msra.mxu0 %v1175
      %1263 = vmatpush.msra.mxu0 %v1173
      %1264 = vmatpush.msra.mxu0 %v1171
      %1265 = vmatpush.msra.mxu0 %v1169
      %1266 = vmatpush.msra.mxu0 %v1167
      %1267 = vmatpush.msra.mxu0 %v1165
      %1268 = vmatpush.msra.mxu0 %v1163
      %1269 = vmatpush.msra.mxu0 %v1161
      %1270 = vmatpush.msra.mxu0 %v1159
      %1271 = vmatpush.msra.mxu0 %v1157
      %1272 = vmatmul.f32.gmra.mxu0 %v1195
      %v1273 = vpop.f32.mrf.mxu0
      %v1274 = vadd.f32 %v1254, %v1273
      %1275 = vdwg.mxu0
      %v1276 = vsel %vm1193, %v1189, 0.0
      %v1277 = vsel %vm1193, %v1190, 0.0
      %v1278 = vadd.f32 %v1276, %v1277
      %1279 = vadd.xlane.f32.xlu0 %v1278
      %v1280 = vpop.xlane.xlu0 %1279
      %v1281 = vrot.slane %v1280, 4
      %v1282 = vadd.f32 %v1280, %v1281
      %v1283 = vrot.slane %v1282, 2
      %v1284 = vadd.f32 %v1282, %v1283
      %v1285 = vrot.slane %v1284, 1
      %v1286 = vadd.f32 %v1284, %v1285
      %s1287 = vtos %v1286
      %v1289 = vperm.slane %v338, 0
      %v1290 = vperm.slane %v338, 1
      %v1293 = vadd.f32 %v1234, %v1289
      %v1294 = vadd.f32 %v1274, %v1290
      %v1295 = vstv %s1287
      %v1296 = vadd.f32 %v1295, %v1234
      %v1297 = vadd.f32 %v1295, %v1274
      %v1298 = vadd.f32 %v1296, 1.0
      %v1299 = vadd.f32 %v1297, 1.0
      %v1302 = vrot.slane %v1293, 1
      %v1303 = vrot.slane %v1294, 1
      %v1306 = vsub.f32 %v1298, %v1302
      %v1307 = vsub.f32 %v1299, %v1303
      %v1308 = vsub.f32 %v1295, %v1293
      %v1309 = vsub.f32 %v1295, %v1294
      %v1312 = vrot.slane %v1306, 7
      %v1313 = vrot.slane %v1307, 7
      %v1316 = vrcp.pop %v1312
      %v1317 = vmul.f32 %v1312, %v1316
      %v1318 = vsub.f32 1.0, %v1317
      %v1319 = vmul.f32 %v1316, %v1318
      %v1320 = vadd.f32 %v1316, %v1319
      %vm1321 = vweird.f32 %v1312
      %vm1322 = vweird.f32 %v1316
      %vm1323 = vmor %vm1321, %vm1322
      %v1324 = vsel %vm1323, %v1316, %v1320
      %v1325 = vand.u32 2147483647, %v1312
      %vm1326 = vcmp.eq.f32.partialorder %v1325, 8.507059e+37
      %v1327 = vand.u32 %v1312, 2147483648
      %v1328 = vor.u32 1.1754944e-38, %v1327
      %v1329 = vsel %vm1326, %v1328, %v1324
      %v1330 = vmul.f32 %v1308, %v1329
      %v1331 = vrcp.pop %v1313
      %v1332 = vmul.f32 %v1313, %v1331
      %v1333 = vsub.f32 1.0, %v1332
      %v1334 = vmul.f32 %v1331, %v1333
      %v1335 = vadd.f32 %v1331, %v1334
      %vm1336 = vweird.f32 %v1313
      %vm1337 = vweird.f32 %v1331
      %vm1338 = vmor %vm1336, %vm1337
      %v1339 = vsel %vm1338, %v1331, %v1335
      %v1340 = vand.u32 2147483647, %v1313
      %vm1341 = vcmp.eq.f32.partialorder %v1340, 8.507059e+37
      %v1342 = vand.u32 %v1313, 2147483648
      %v1343 = vor.u32 1.1754944e-38, %v1342
      %v1344 = vsel %vm1341, %v1343, %v1339
      %v1345 = vmul.f32 %v1309, %v1344
      %v1346 = vsub.f32 1.0, %v1330
      %v1347 = vsub.f32 1.0, %v1345
      %vm1348 = vcmp.lt.f32.partialorder %v1234, 0.5
      %vm1349 = vcmp.lt.f32.partialorder %v1274, 0.5
      %v1352 = vrot.slane %v1234, 1
      %v1353 = vrot.slane %v1274, 1
      %v1356 = vsub.f32 %v1296, %v1352
      %v1357 = vsub.f32 %v1297, %v1353
      %v1358 = vsel %vm1348, 1.0, %v1356
      %v1359 = vsel %vm1349, 1.0, %v1357
      %v1360 = vsub.f32 %v1295, %v1234
      %v1361 = vsub.f32 %v1295, %v1274
      %v1364 = vrot.slane %v1358, 7
      %v1365 = vrot.slane %v1359, 7
      %v1368 = vrcp.pop %v1364
      %v1369 = vmul.f32 %v1364, %v1368
      %v1370 = vsub.f32 1.0, %v1369
      %v1371 = vmul.f32 %v1368, %v1370
      %v1372 = vadd.f32 %v1368, %v1371
      %vm1373 = vweird.f32 %v1364
      %vm1374 = vweird.f32 %v1368
      %vm1375 = vmor %vm1373, %vm1374
      %v1376 = vsel %vm1375, %v1368, %v1372
      %v1377 = vand.u32 2147483647, %v1364
      %vm1378 = vcmp.eq.f32.partialorder %v1377, 8.507059e+37
      %v1379 = vand.u32 %v1364, 2147483648
      %v1380 = vor.u32 1.1754944e-38, %v1379
      %v1381 = vsel %vm1378, %v1380, %v1376
      %v1382 = vmul.f32 %v1360, %v1381
      %v1383 = vrcp.pop %v1365
      %v1384 = vmul.f32 %v1365, %v1383
      %v1385 = vsub.f32 1.0, %v1384
      %v1386 = vmul.f32 %v1383, %v1385
      %v1387 = vadd.f32 %v1383, %v1386
      %vm1388 = vweird.f32 %v1365
      %vm1389 = vweird.f32 %v1383
      %vm1390 = vmor %vm1388, %vm1389
      %v1391 = vsel %vm1390, %v1383, %v1387
      %v1392 = vand.u32 2147483647, %v1365
      %vm1393 = vcmp.eq.f32.partialorder %v1392, 8.507059e+37
      %v1394 = vand.u32 %v1365, 2147483648
      %v1395 = vor.u32 1.1754944e-38, %v1394
      %v1396 = vsel %vm1393, %v1395, %v1391
      %v1397 = vmul.f32 %v1361, %v1396
      %v1398 = vsub.f32 1.0, %v1382
      %v1399 = vsub.f32 1.0, %v1397
      %v1402 = vrot.slane %v1398, 1
      %v1403 = vrot.slane %v1399, 1
      %v1406 = vsel %vm1348, 0.0, %v1402
      %v1407 = vsel %vm1349, 0.0, %v1403
      %v1410 = vrot.slane %v1406, 7
      %v1411 = vrot.slane %v1407, 7
      %v1414 = vsub.f32 %v1346, %v1410
      %v1415 = vsub.f32 %v1347, %v1411
      %v1416 = vmax.f32 %v406, 0.0
      %1419 = vst [vmem:[#allocation1] sm:$0xff] %v1414
      %1420 = vst [vmem:[#allocation1 + $0x9] sm:$0xff] %v1415
      %s1421 = scalar_lea.vmem [#allocation1], 1
      %v1422 = vld [vmem:[%s1421] ss:$9 sm:$0xff]
      %v1424 = vmul.f32 %v1416, %v1422
      %v1426 = vperm.slane %v1424, 0
      %v1427 = vperm.slane %v1424, 1
      %v1430 = vsel %vm1193, %v1426, 0.0
      %v1431 = vsel %vm1193, %v1427, 0.0
      %v1432 = vadd.f32 %v1430, %v1431
      %1433 = vadd.xlane.f32.xlu0 %v1432
      %v1434 = vpop.xlane.xlu0 %1433
      %v1435 = vrot.slane %v1434, 4
      %v1436 = vadd.f32 %v1434, %v1435
      %v1437 = vrot.slane %v1436, 2
      %v1438 = vadd.f32 %v1436, %v1437
      %v1439 = vrot.slane %v1438, 1
      %v1440 = vadd.f32 %v1438, %v1439
      %s1441 = vtos %v1440
      %p1442 = scmp.eq.s32.totalorder %s21, 0
      // Predicated region
      $region41: #{lovasz_hinge_loss.1} parent=39 // pred_check
        %p1443 = pneg %p1442
      $region42: #{lovasz_hinge_loss.1} parent=39 // pred_check_branch
        %1445 = sbr.rel (%p1443) target = $region44
      $region43: #{lovasz_hinge_loss.1} parent=39 // pred_region
        %1446 = vst [vmem:[%s335] sm:$0x1] 0.0
      $region44: #{lovasz_hinge_loss.1} parent=39 // pred_fallthru
        _
      %v1447 = vld [vmem:[%s335] sm:$0x1]
      %v1448 = vstv %s1441
      %v1449 = vadd.f32 %v1447, %v1448
      %1450 = vst [vmem:[%s335] sm:$0x1] %v1449
      %p1451 = scmp.lt.s32.totalorder %s20, 1
      %s1452 = scalar_select %p1451, %s20, 1
      %s1453 = scalar_lea.vmem %s5, %s1452
      // Predicated region
      $region45: #{lovasz_hinge_loss.1} parent=39 // pred_check
        %p1454 = pneg %p180
      $region46: #{lovasz_hinge_loss.1} parent=39 // pred_check_branch
        %1456 = sbr.rel (%p1454) target = $region48
      $region47: #{lovasz_hinge_loss.1} parent=39 // pred_region
        _
      $region48: #{lovasz_hinge_loss.1} parent=39 // pred_fallthru
        _
    $region40: #{lovasz_hinge_loss.1} parent=5 // pred_fallthru
      _
    %p1457 = scmp.le.s32.totalorder 2, %s11
    // Predicated region
    $region49: #{lovasz_hinge_loss.1} parent=5 // pred_check
      %p1458 = pneg %p1457
    $region50: #{lovasz_hinge_loss.1} parent=5 // pred_check_branch
      %1460 = sbr.rel (%p1458) target = $region52
    $region51: #{lovasz_hinge_loss.1} parent=5 // pred_region
      %s1461 = ssub.s32 %s11, 2
      // Predicated region
      $region53: #{lovasz_hinge_loss.1} parent=51 // pred_check
        %p1462 = pneg %p186
      $region54: #{lovasz_hinge_loss.1} parent=51 // pred_check_branch
        %1464 = sbr.rel (%p1462) target = $region56
      $region55: #{lovasz_hinge_loss.1} parent=51 // pred_region
        %p1465 = scmp.lt.s32.totalorder %s22, 1
        %s1466 = scalar_select %p1465, %s22, 1
        %s1467 = scalar_lea.vmem %s5, %s1466
      $region56: #{lovasz_hinge_loss.1} parent=51 // pred_fallthru
        _
    $region52: #{lovasz_hinge_loss.1} parent=5 // pred_fallthru
      _
  $region6: #{lovasz_hinge_loss.1} parent=0 // loop_footer
    %s15 = sadd.s32 1, %s11
  $region7: #{lovasz_hinge_loss.1} parent=0 // loop_footer_branch
    %10 = sbr.rel target = $region3
  $region8: #{lovasz_hinge_loss.1} parent=0 // loop_exit
    _

</llo_original>
